<compile_context>
chip_gen: v7x
topology: tpu7x:2x2x1
jax: 0.10.0
libtpu: 0.0.40
codegen_flags: <defaults>
</compile_context>

<pallas_src>
import jax
import jax.numpy as jnp
from jax.experimental import pallas as pl
from jax.experimental.pallas import tpu as pltpu

NUM_TOKENS = 280  # hardcoded in the PyTorch module (embedding_dim * 280)


# ---------------------------------------------------------------------------
# Weight-prep helpers (run ONCE, not per forward call)
# ---------------------------------------------------------------------------
def _reorder_ifgo_to_ifog(a, H):
    """Reorder leading 4H axis from PyTorch LSTM gate order [i,f,g,o] to [i,f,o,g]."""
    return jnp.concatenate([a[0:2 * H], a[3 * H:4 * H], a[2 * H:3 * H]], axis=0)


def prepare_params(params):
    """One-time weight preparation (hoisted out of forward()).

    - reorders LSTM gates to [i, f, o, g]
    - pre-scales the g-gate rows by 2 so the kernel can use
      tanh(z) = 2*sigmoid(2z) - 1 with a single full-vreg sigmoid
    - transposes weights / reshapes biases / casts W_ih to bf16
    """
    H = params["w_hh"].shape[1]

    w_ih = _reorder_ifgo_to_ifog(params["w_ih"], H)                # (4H, IN)
    w_hh = _reorder_ifgo_to_ifog(params["w_hh"], H)                # (4H, H)
    b = _reorder_ifgo_to_ifog(params["b_ih"] + params["b_hh"], H)  # (4H,)

    # Pre-scale g-gate (last H rows after reorder) by 2 — exact (power of 2).
    scale = jnp.concatenate([jnp.ones((3 * H,), jnp.float32),
                             jnp.full((H,), 2.0, jnp.float32)])
    w_ih = w_ih * scale[:, None]
    w_hh = w_hh * scale[:, None]
    b = b * scale

    score = [(w.T.astype(jnp.float32), bvec.reshape(1, -1).astype(jnp.float32))
             for (w, bvec) in params["score"]]

    return dict(
        emb=params["emb"],
        w_ih_t=w_ih.T.astype(jnp.bfloat16),     # (IN, 4H) bf16 (MXU operand)
        w_hh_t=w_hh.T.astype(jnp.float32),      # (H, 4H)  f32
        b_row=b.reshape(1, -1).astype(jnp.float32),  # (1, 4H)
        score=score,
    )


# ---------------------------------------------------------------------------
# Fused kernel: input projection + LSTM recurrence + score MLP, single call.
# One grid step processes a chunk of Bc sequences stacked along M (time-major).
# ---------------------------------------------------------------------------
def make_fused_kernel(seq, Bc, H, n_layers):
    def kernel(*refs):
        x_ref, h0_ref, c0_ref, wih_ref, whh_ref, b_ref = refs[:6]
        layer_refs = refs[6:6 + 2 * n_layers]
        out_ref = refs[6 + 2 * n_layers]
        gx_scr, hid_scr = refs[6 + 2 * n_layers + 1:]

        # Hoisted input projection for the whole chunk:
        # (seq*Bc, IN) @ (IN, 4H) + b -> (seq*Bc, 4H), bf16 ops / f32 acc.
        gx_scr[...] = (
            jnp.dot(x_ref[...], wih_ref[...],
                    preferred_element_type=jnp.float32)
            + b_ref[...])

        whh = whh_ref[...]  # (H, 4H), resident for the whole recurrence

        def step(t, carry):
            h, c = carry  # (Bc, H) f32 each
            row = pl.multiple_of(t * Bc, Bc)
            gates = (gx_scr[pl.ds(row, Bc), :]
                     + jnp.dot(h, whh, preferred_element_type=jnp.float32))
            # Gate order [i, f, o | g]; g columns were pre-scaled by 2 at
            # weight-prep time -> ONE full-vreg sigmoid, tanh(z)=2*sig(2z)-1.
            act = jax.nn.sigmoid(gates)
            i = act[:, 0 * H:1 * H]
            f = act[:, 1 * H:2 * H]
            o = act[:, 2 * H:3 * H]
            g = 2.0 * act[:, 3 * H:4 * H] - 1.0
            c_new = f * c + i * g
            h_new = o * jnp.tanh(c_new)
            hid_scr[pl.ds(row, Bc), :] = h_new
            return h_new, c_new

        jax.lax.fori_loop(0, seq, step, (h0_ref[...], c0_ref[...]),
                          unroll=min(seq, 8))

        # out[row_indices] is identity; mean over the singleton batch dim is
        # identity too -> score MLP acts directly on the (seq*Bc, H) hiddens.
        x = hid_scr[...]
        for li in range(n_layers):
            w_t = layer_refs[2 * li][...]
            bb = layer_refs[2 * li + 1][...]
            x = jax.nn.sigmoid(
                jnp.dot(x, w_t, preferred_element_type=jnp.float32) + bb)
        out_ref[...] = x

    return kernel


def fused_forward(x_tm, h0, c0, prepped, *, seq, Bc):
    """x_tm: (chunks, seq*Bc, IN) bf16 time-major; h0/c0: (chunks, Bc, H)."""
    num_chunks = x_tm.shape[0]
    IN = x_tm.shape[-1]
    H = prepped["w_hh_t"].shape[0]
    score = prepped["score"]
    n_layers = len(score)
    out_dim = score[-1][0].shape[1]

    # --- VMEM budget guard (structure holds whole chunk resident) ---------
    bytes_w = (IN * 4 * H * 2 + H * 4 * H * 4 + 4 * H * 4
               + sum(w.size * 4 + b.size * 4 for w, b in score))
    bytes_io = seq * Bc * IN * 2 + seq * Bc * out_dim * 4
    bytes_scr = seq * Bc * 4 * H * 4 + seq * Bc * H * 4
    est = 2 * (bytes_io + bytes_w) + bytes_scr  # 2x: double buffering
    if est > 40 * (1 << 20):
        # TODO(synk): tile the seq-parallel phases (input projection / MLP)
        # over a seq grid for very long sequences instead of failing.
        raise ValueError(
            f"Estimated VMEM footprint {est / 2**20:.1f} MiB exceeds the "
            "v7x-safe budget; reduce block_batch or sequence length.")
    vmem_limit = int(min(max(2 * est, 32 * (1 << 20)), 56 * (1 << 20)))

    layer_args = []
    layer_specs = []
    for w_t, b_r in score:
        layer_args += [w_t, b_r]
        layer_specs += [pl.BlockSpec(w_t.shape, lambda g: (0, 0)),
                        pl.BlockSpec(b_r.shape, lambda g: (0, 0))]

    out = pl.pallas_call(
        make_fused_kernel(seq, Bc, H, n_layers),
        out_shape=jax.ShapeDtypeStruct((num_chunks, seq * Bc, out_dim),
                                       jnp.float32),
        grid=(num_chunks,),
        in_specs=[
            pl.BlockSpec((None, seq * Bc, IN), lambda g: (g, 0, 0)),
            pl.BlockSpec((None, Bc, H), lambda g: (g, 0, 0)),
            pl.BlockSpec((None, Bc, H), lambda g: (g, 0, 0)),
            pl.BlockSpec(prepped["w_ih_t"].shape, lambda g: (0, 0)),
            pl.BlockSpec(prepped["w_hh_t"].shape, lambda g: (0, 0)),
            pl.BlockSpec(prepped["b_row"].shape, lambda g: (0, 0)),
            *layer_specs,
        ],
        out_specs=pl.BlockSpec((None, seq * Bc, out_dim), lambda g: (g, 0, 0)),
        scratch_shapes=[pltpu.VMEM((seq * Bc, 4 * H), jnp.float32),  # gates_x
                        pltpu.VMEM((seq * Bc, H), jnp.float32)],     # hiddens
        compiler_params=pltpu.CompilerParams(
            dimension_semantics=("parallel",),   # v7x: batch chunks on 2 TCs
            vmem_limit_bytes=vmem_limit),
    )(x_tm, h0, c0, prepped["w_ih_t"], prepped["w_hh_t"], prepped["b_row"],
      *layer_args)
    return out


# ---------------------------------------------------------------------------
# Parameter init (deterministic, PyTorch-like uniform fan-in init)
# ---------------------------------------------------------------------------
def init_params(key, vocab_size, embedding_dim, linear_shape, padding_idx=0):
    H = linear_shape[0][0]
    IN = embedding_dim * NUM_TOKENS
    keys = jax.random.split(key, 5 + 2 * len(linear_shape))

    emb = jax.random.normal(keys[0], (vocab_size, embedding_dim), jnp.float32)
    emb = emb.at[padding_idx].set(0.0)  # padding_idx row is zeros

    k = 1.0 / jnp.sqrt(jnp.float32(H))
    w_ih = jax.random.uniform(keys[1], (4 * H, IN), jnp.float32, -k, k)
    w_hh = jax.random.uniform(keys[2], (4 * H, H), jnp.float32, -k, k)
    b_ih = jax.random.uniform(keys[3], (4 * H,), jnp.float32, -k, k)
    b_hh = jax.random.uniform(keys[4], (4 * H,), jnp.float32, -k, k)

    score = []
    for li, (fi, fo) in enumerate(linear_shape):
        kk = 1.0 / jnp.sqrt(jnp.float32(fi))
        w = jax.random.uniform(keys[5 + 2 * li], (fo, fi), jnp.float32, -kk, kk)
        b = jax.random.uniform(keys[6 + 2 * li], (fo,), jnp.float32, -kk, kk)
        score.append((w, b))

    return dict(emb=emb, w_ih=w_ih, w_hh=w_hh, b_ih=b_ih, b_hh=b_hh,
                score=score)


# ---------------------------------------------------------------------------
# Forward: JAX glue (gather + layout) + one fused Pallas kernel
# ---------------------------------------------------------------------------
def forward(prepped, Xb, hidden_key, *, block_batch=8):
    """Batched forward. Xb: (B, seq, 280) int tokens -> (B, seq, out_dim)."""
    B, seq, _ = Xb.shape
    H = prepped["w_hh_t"].shape[0]
    out_dim = prepped["score"][-1][0].shape[1]

    # Embedding lookup (tiny table; XLA gather) + flatten: (B, seq, E*280)
    emb = jnp.take(prepped["emb"], Xb, axis=0)
    inputs = emb.reshape(B, seq, -1).astype(jnp.bfloat16)
    IN = inputs.shape[-1]

    # Random hidden/cell init (deterministic here), matches torch.randn(1,1,H)
    kh, kc = jax.random.split(hidden_key)
    h0 = jax.random.normal(kh, (B, H), jnp.float32)
    c0 = jax.random.normal(kc, (B, H), jnp.float32)

    # Pad batch to a multiple of the per-grid-step chunk size Bc.
    Bc = max(1, min(block_batch, B))
    num_chunks = (B + Bc - 1) // Bc
    B_pad = num_chunks * Bc
    if B_pad != B:
        pad = B_pad - B
        inputs = jnp.concatenate(
            [inputs, jnp.zeros((pad, seq, IN), inputs.dtype)], axis=0)
        h0 = jnp.concatenate([h0, jnp.zeros((pad, H), h0.dtype)], axis=0)
        c0 = jnp.concatenate([c0, jnp.zeros((pad, H), c0.dtype)], axis=0)

    # Chunk-major / time-major / batch-within-chunk layout so each LSTM step
    # reads one contiguous (Bc, 4H) slice of the precomputed gate matrix.
    x_tm = (inputs.reshape(num_chunks, Bc, seq, IN)
                  .transpose(0, 2, 1, 3)
                  .reshape(num_chunks, seq * Bc, IN))
    h0 = h0.reshape(num_chunks, Bc, H)
    c0 = c0.reshape(num_chunks, Bc, H)

    out = fused_forward(x_tm, h0, c0, prepped, seq=seq, Bc=Bc)

    out = (out.reshape(num_chunks, seq, Bc, out_dim)
              .transpose(0, 2, 1, 3)
              .reshape(B_pad, seq, out_dim))
    return out[:B]


def forward_single(prepped, X, hidden_key):
    """Spec-equivalent single-sequence forward: X (seq, 280) -> (seq, out)."""
    return forward(prepped, X[None], hidden_key)[0]


if __name__ == "__main__":
    key = jax.random.PRNGKey(0)
    kparam, kdata, khid = jax.random.split(key, 3)

    vocab_size = 50
    embedding_dim = 4
    linear_shape = [(32, 16), (16, 8)]   # first_linear = 32 = LSTM hidden size
    seq_len = 4
    batch = 16                            # 2 chunks of 8 -> exercises the grid

    params = init_params(kparam, vocab_size, embedding_dim, linear_shape)
    prepped = prepare_params(params)      # one-time weight prep (hoisted)

    Xb = jax.random.randint(kdata, (batch, seq_len, NUM_TOKENS), 0, vocab_size,
                            dtype=jnp.int32)

    fwd = jax.jit(forward)
    out = fwd(prepped, Xb, khid)
    jax.block_until_ready(out)
    assert out.shape == (batch, seq_len, linear_shape[-1][1])
    assert bool(jnp.all(jnp.isfinite(out)))

    # Spec-shaped single-sequence path (batch of 1) also runs cleanly.
    out1 = jax.jit(forward_single)(prepped, Xb[0], khid)
    jax.block_until_ready(out1)
    assert out1.shape == (seq_len, linear_shape[-1][1])
    assert bool(jnp.all(jnp.isfinite(out1)))

    print("KERNEL_OK")
</pallas_src>

<mosaic_0001>
module attributes {stable_mosaic.version = 11 : i64} {
  func.func @kernel(%arg0: i32, %arg1: memref<1x32x1120xbf16, #tpu.memory_space<vmem>>, %arg2: memref<1x8x32xf32, #tpu.memory_space<vmem>>, %arg3: memref<1x8x32xf32, #tpu.memory_space<vmem>>, %arg4: memref<1120x128xbf16, #tpu.memory_space<vmem>>, %arg5: memref<32x128xf32, #tpu.memory_space<vmem>>, %arg6: memref<1x128xf32, #tpu.memory_space<vmem>>, %arg7: memref<32x16xf32, #tpu.memory_space<vmem>>, %arg8: memref<1x16xf32, #tpu.memory_space<vmem>>, %arg9: memref<16x8xf32, #tpu.memory_space<vmem>>, %arg10: memref<1x8xf32, #tpu.memory_space<vmem>>, %arg11: memref<1x32x8xf32, #tpu.memory_space<vmem>>, %arg12: memref<32x128xf32, #tpu.memory_space<vmem>>, %arg13: memref<32x32xf32, #tpu.memory_space<vmem>>) attributes {dimension_semantics = [#tpu.dimension_semantics<parallel>], iteration_bounds = array<i64: 2>, scalar_prefetch = 0 : i64, scratch_operands = 2 : i64, tpu.core_type = #tpu.core_type<tc>, window_params = [{transform_indices = @transform_0, window_bounds = array<i64: 1, 32, 1120>}, {transform_indices = @transform_1, window_bounds = array<i64: 1, 8, 32>}, {transform_indices = @transform_2, window_bounds = array<i64: 1, 8, 32>}, {pipeline_mode = #tpu.pipeline_mode<synchronous>, transform_indices = @transform_3, window_bounds = array<i64: 1120, 128>}, {pipeline_mode = #tpu.pipeline_mode<synchronous>, transform_indices = @transform_4, window_bounds = array<i64: 32, 128>}, {pipeline_mode = #tpu.pipeline_mode<synchronous>, transform_indices = @transform_5, window_bounds = array<i64: 1, 128>}, {pipeline_mode = #tpu.pipeline_mode<synchronous>, transform_indices = @transform_6, window_bounds = array<i64: 32, 16>}, {pipeline_mode = #tpu.pipeline_mode<synchronous>, transform_indices = @transform_7, window_bounds = array<i64: 1, 16>}, {pipeline_mode = #tpu.pipeline_mode<synchronous>, transform_indices = @transform_8, window_bounds = array<i64: 16, 8>}, {pipeline_mode = #tpu.pipeline_mode<synchronous>, transform_indices = @transform_9, window_bounds = array<i64: 1, 8>}, {transform_indices = @transform_10, window_bounds = array<i64: 1, 32, 8>}]} {
    %c0 = arith.constant 0 : index
    %c0_0 = arith.constant 0 : index
    %c0_1 = arith.constant 0 : index
    %0 = vector.load %arg1[%c0, %c0_0, %c0_1] : memref<1x32x1120xbf16, #tpu.memory_space<vmem>>, vector<1x32x1120xbf16>
    %1 = vector.shape_cast %0 : vector<1x32x1120xbf16> to vector<32x1120xbf16>
    %c0_2 = arith.constant 0 : index
    %c0_3 = arith.constant 0 : index
    %2 = vector.load %arg4[%c0_2, %c0_3] : memref<1120x128xbf16, #tpu.memory_space<vmem>>, vector<1120x128xbf16>
    %cst = arith.constant dense<0.000000e+00> : vector<32x128xf32>
    %3 = tpu.matmul %1, %2, %cst {dimension_numbers = #tpu.dot_dimension_numbers<[1], [0], [0], [1], [0, 0, 1, 1], [], []>} : vector<32x1120xbf16>, vector<1120x128xbf16>, vector<32x128xf32> -> vector<32x128xf32>
    %c0_4 = arith.constant 0 : index
    %c0_5 = arith.constant 0 : index
    %4 = vector.load %arg6[%c0_4, %c0_5] : memref<1x128xf32, #tpu.memory_space<vmem>>, vector<1x128xf32>
    %5 = vector.broadcast %4 : vector<1x128xf32> to vector<32x128xf32>
    %6 = arith.addf %3, %5 : vector<32x128xf32>
    %c0_6 = arith.constant 0 : index
    %c0_7 = arith.constant 0 : index
    %7 = vector.load %arg12[%c0_6, %c0_7] : memref<32x128xf32, #tpu.memory_space<vmem>>, vector<32x128xf32>
    tpu.vector_store %arg12[%c0_6, %c0_7], %6 {strides = array<i32>} : memref<32x128xf32, #tpu.memory_space<vmem>>, vector<32x128xf32>,
    %c0_8 = arith.constant 0 : index
    %c0_9 = arith.constant 0 : index
    %8 = vector.load %arg5[%c0_8, %c0_9] : memref<32x128xf32, #tpu.memory_space<vmem>>, vector<32x128xf32>
    %c0_10 = arith.constant 0 : index
    %c0_11 = arith.constant 0 : index
    %c0_12 = arith.constant 0 : index
    %9 = vector.load %arg2[%c0_10, %c0_11, %c0_12] : memref<1x8x32xf32, #tpu.memory_space<vmem>>, vector<1x8x32xf32>
    %10 = vector.shape_cast %9 : vector<1x8x32xf32> to vector<8x32xf32>
    %c0_13 = arith.constant 0 : index
    %c0_14 = arith.constant 0 : index
    %c0_15 = arith.constant 0 : index
    %11 = vector.load %arg3[%c0_13, %c0_14, %c0_15] : memref<1x8x32xf32, #tpu.memory_space<vmem>>, vector<1x8x32xf32>
    %12 = vector.shape_cast %11 : vector<1x8x32xf32> to vector<8x32xf32>
    %c0_i32 = arith.constant 0 : i32
    %c8_i32 = arith.constant 8 : i32
    %13 = arith.muli %c0_i32, %c8_i32 : i32
    %14 = tpu.assume_multiple %13, 8 : i32
    %15 = arith.index_cast %14 : i32 to index
    %c0_16 = arith.constant 0 : index
    %16 = vector.load %arg12[%15, %c0_16] : memref<32x128xf32, #tpu.memory_space<vmem>>, vector<8x128xf32>
    %cst_17 = arith.constant dense<0.000000e+00> : vector<8x128xf32>
    %17 = tpu.matmul %10, %8, %cst_17 {dimension_numbers = #tpu.dot_dimension_numbers<[1], [0], [0], [1], [0, 0, 1, 1], [], []>} : vector<8x32xf32>, vector<32x128xf32>, vector<8x128xf32> -> vector<8x128xf32>
    %18 = arith.addf %16, %17 : vector<8x128xf32>
    %19 = arith.negf %18 : vector<8x128xf32>
    %20 = math.exp %19 : vector<8x128xf32>
    %cst_18 = arith.constant 1.000000e+00 : f32
    %21 = vector.broadcast %cst_18 : f32 to vector<8x128xf32>
    %22 = arith.addf %21, %20 : vector<8x128xf32>
    %23 = arith.divf %21, %22 : vector<8x128xf32>
    %24 = vector.extract_strided_slice %23 {offsets = [0, 0], sizes = [8, 32], strides = [1, 1]} : vector<8x128xf32> to vector<8x32xf32>
    %25 = vector.extract_strided_slice %23 {offsets = [0, 32], sizes = [8, 32], strides = [1, 1]} : vector<8x128xf32> to vector<8x32xf32>
    %26 = vector.extract_strided_slice %23 {offsets = [0, 64], sizes = [8, 32], strides = [1, 1]} : vector<8x128xf32> to vector<8x32xf32>
    %27 = vector.extract_strided_slice %23 {offsets = [0, 96], sizes = [8, 32], strides = [1, 1]} : vector<8x128xf32> to vector<8x32xf32>
    %cst_19 = arith.constant 2.000000e+00 : f32
    %28 = vector.broadcast %cst_19 : f32 to vector<8x32xf32>
    %29 = arith.mulf %28, %27 : vector<8x32xf32>
    %cst_20 = arith.constant 1.000000e+00 : f32
    %30 = vector.broadcast %cst_20 : f32 to vector<8x32xf32>
    %31 = arith.subf %29, %30 : vector<8x32xf32>
    %32 = arith.mulf %25, %12 : vector<8x32xf32>
    %33 = arith.mulf %24, %31 : vector<8x32xf32>
    %34 = arith.addf %32, %33 : vector<8x32xf32>
    %35 = math.tanh %34 : vector<8x32xf32>
    %36 = arith.mulf %26, %35 : vector<8x32xf32>
    %37 = arith.index_cast %14 : i32 to index
    %c0_21 = arith.constant 0 : index
    %38 = vector.load %arg13[%37, %c0_21] : memref<32x32xf32, #tpu.memory_space<vmem>>, vector<8x32xf32>
    tpu.vector_store %arg13[%37, %c0_21], %36 {strides = array<i32>} : memref<32x32xf32, #tpu.memory_space<vmem>>, vector<8x32xf32>,
    %c1_i32 = arith.constant 1 : i32
    %c8_i32_22 = arith.constant 8 : i32
    %39 = arith.muli %c1_i32, %c8_i32_22 : i32
    %40 = tpu.assume_multiple %39, 8 : i32
    %41 = arith.index_cast %40 : i32 to index
    %c0_23 = arith.constant 0 : index
    %42 = vector.load %arg12[%41, %c0_23] : memref<32x128xf32, #tpu.memory_space<vmem>>, vector<8x128xf32>
    %cst_24 = arith.constant dense<0.000000e+00> : vector<8x128xf32>
    %43 = tpu.matmul %36, %8, %cst_24 {dimension_numbers = #tpu.dot_dimension_numbers<[1], [0], [0], [1], [0, 0, 1, 1], [], []>} : vector<8x32xf32>, vector<32x128xf32>, vector<8x128xf32> -> vector<8x128xf32>
    %44 = arith.addf %42, %43 : vector<8x128xf32>
    %45 = arith.negf %44 : vector<8x128xf32>
    %46 = math.exp %45 : vector<8x128xf32>
    %cst_25 = arith.constant 1.000000e+00 : f32
    %47 = vector.broadcast %cst_25 : f32 to vector<8x128xf32>
    %48 = arith.addf %47, %46 : vector<8x128xf32>
    %49 = arith.divf %47, %48 : vector<8x128xf32>
    %50 = vector.extract_strided_slice %49 {offsets = [0, 0], sizes = [8, 32], strides = [1, 1]} : vector<8x128xf32> to vector<8x32xf32>
    %51 = vector.extract_strided_slice %49 {offsets = [0, 32], sizes = [8, 32], strides = [1, 1]} : vector<8x128xf32> to vector<8x32xf32>
    %52 = vector.extract_strided_slice %49 {offsets = [0, 64], sizes = [8, 32], strides = [1, 1]} : vector<8x128xf32> to vector<8x32xf32>
    %53 = vector.extract_strided_slice %49 {offsets = [0, 96], sizes = [8, 32], strides = [1, 1]} : vector<8x128xf32> to vector<8x32xf32>
    %cst_26 = arith.constant 2.000000e+00 : f32
    %54 = vector.broadcast %cst_26 : f32 to vector<8x32xf32>
    %55 = arith.mulf %54, %53 : vector<8x32xf32>
    %cst_27 = arith.constant 1.000000e+00 : f32
    %56 = vector.broadcast %cst_27 : f32 to vector<8x32xf32>
    %57 = arith.subf %55, %56 : vector<8x32xf32>
    %58 = arith.mulf %51, %34 : vector<8x32xf32>
    %59 = arith.mulf %50, %57 : vector<8x32xf32>
    %60 = arith.addf %58, %59 : vector<8x32xf32>
    %61 = math.tanh %60 : vector<8x32xf32>
    %62 = arith.mulf %52, %61 : vector<8x32xf32>
    %63 = arith.index_cast %40 : i32 to index
    %c0_28 = arith.constant 0 : index
    %64 = vector.load %arg13[%63, %c0_28] : memref<32x32xf32, #tpu.memory_space<vmem>>, vector<8x32xf32>
    tpu.vector_store %arg13[%63, %c0_28], %62 {strides = array<i32>} : memref<32x32xf32, #tpu.memory_space<vmem>>, vector<8x32xf32>,
    %c2_i32 = arith.constant 2 : i32
    %c8_i32_29 = arith.constant 8 : i32
    %65 = arith.muli %c2_i32, %c8_i32_29 : i32
    %66 = tpu.assume_multiple %65, 8 : i32
    %67 = arith.index_cast %66 : i32 to index
    %c0_30 = arith.constant 0 : index
    %68 = vector.load %arg12[%67, %c0_30] : memref<32x128xf32, #tpu.memory_space<vmem>>, vector<8x128xf32>
    %cst_31 = arith.constant dense<0.000000e+00> : vector<8x128xf32>
    %69 = tpu.matmul %62, %8, %cst_31 {dimension_numbers = #tpu.dot_dimension_numbers<[1], [0], [0], [1], [0, 0, 1, 1], [], []>} : vector<8x32xf32>, vector<32x128xf32>, vector<8x128xf32> -> vector<8x128xf32>
    %70 = arith.addf %68, %69 : vector<8x128xf32>
    %71 = arith.negf %70 : vector<8x128xf32>
    %72 = math.exp %71 : vector<8x128xf32>
    %cst_32 = arith.constant 1.000000e+00 : f32
    %73 = vector.broadcast %cst_32 : f32 to vector<8x128xf32>
    %74 = arith.addf %73, %72 : vector<8x128xf32>
    %75 = arith.divf %73, %74 : vector<8x128xf32>
    %76 = vector.extract_strided_slice %75 {offsets = [0, 0], sizes = [8, 32], strides = [1, 1]} : vector<8x128xf32> to vector<8x32xf32>
    %77 = vector.extract_strided_slice %75 {offsets = [0, 32], sizes = [8, 32], strides = [1, 1]} : vector<8x128xf32> to vector<8x32xf32>
    %78 = vector.extract_strided_slice %75 {offsets = [0, 64], sizes = [8, 32], strides = [1, 1]} : vector<8x128xf32> to vector<8x32xf32>
    %79 = vector.extract_strided_slice %75 {offsets = [0, 96], sizes = [8, 32], strides = [1, 1]} : vector<8x128xf32> to vector<8x32xf32>
    %cst_33 = arith.constant 2.000000e+00 : f32
    %80 = vector.broadcast %cst_33 : f32 to vector<8x32xf32>
    %81 = arith.mulf %80, %79 : vector<8x32xf32>
    %cst_34 = arith.constant 1.000000e+00 : f32
    %82 = vector.broadcast %cst_34 : f32 to vector<8x32xf32>
    %83 = arith.subf %81, %82 : vector<8x32xf32>
    %84 = arith.mulf %77, %60 : vector<8x32xf32>
    %85 = arith.mulf %76, %83 : vector<8x32xf32>
    %86 = arith.addf %84, %85 : vector<8x32xf32>
    %87 = math.tanh %86 : vector<8x32xf32>
    %88 = arith.mulf %78, %87 : vector<8x32xf32>
    %89 = arith.index_cast %66 : i32 to index
    %c0_35 = arith.constant 0 : index
    %90 = vector.load %arg13[%89, %c0_35] : memref<32x32xf32, #tpu.memory_space<vmem>>, vector<8x32xf32>
    tpu.vector_store %arg13[%89, %c0_35], %88 {strides = array<i32>} : memref<32x32xf32, #tpu.memory_space<vmem>>, vector<8x32xf32>,
    %c3_i32 = arith.constant 3 : i32
    %c8_i32_36 = arith.constant 8 : i32
    %91 = arith.muli %c3_i32, %c8_i32_36 : i32
    %92 = tpu.assume_multiple %91, 8 : i32
    %93 = arith.index_cast %92 : i32 to index
    %c0_37 = arith.constant 0 : index
    %94 = vector.load %arg12[%93, %c0_37] : memref<32x128xf32, #tpu.memory_space<vmem>>, vector<8x128xf32>
    %cst_38 = arith.constant dense<0.000000e+00> : vector<8x128xf32>
    %95 = tpu.matmul %88, %8, %cst_38 {dimension_numbers = #tpu.dot_dimension_numbers<[1], [0], [0], [1], [0, 0, 1, 1], [], []>} : vector<8x32xf32>, vector<32x128xf32>, vector<8x128xf32> -> vector<8x128xf32>
    %96 = arith.addf %94, %95 : vector<8x128xf32>
    %97 = arith.negf %96 : vector<8x128xf32>
    %98 = math.exp %97 : vector<8x128xf32>
    %cst_39 = arith.constant 1.000000e+00 : f32
    %99 = vector.broadcast %cst_39 : f32 to vector<8x128xf32>
    %100 = arith.addf %99, %98 : vector<8x128xf32>
    %101 = arith.divf %99, %100 : vector<8x128xf32>
    %102 = vector.extract_strided_slice %101 {offsets = [0, 0], sizes = [8, 32], strides = [1, 1]} : vector<8x128xf32> to vector<8x32xf32>
    %103 = vector.extract_strided_slice %101 {offsets = [0, 32], sizes = [8, 32], strides = [1, 1]} : vector<8x128xf32> to vector<8x32xf32>
    %104 = vector.extract_strided_slice %101 {offsets = [0, 64], sizes = [8, 32], strides = [1, 1]} : vector<8x128xf32> to vector<8x32xf32>
    %105 = vector.extract_strided_slice %101 {offsets = [0, 96], sizes = [8, 32], strides = [1, 1]} : vector<8x128xf32> to vector<8x32xf32>
    %cst_40 = arith.constant 2.000000e+00 : f32
    %106 = vector.broadcast %cst_40 : f32 to vector<8x32xf32>
    %107 = arith.mulf %106, %105 : vector<8x32xf32>
    %cst_41 = arith.constant 1.000000e+00 : f32
    %108 = vector.broadcast %cst_41 : f32 to vector<8x32xf32>
    %109 = arith.subf %107, %108 : vector<8x32xf32>
    %110 = arith.mulf %103, %86 : vector<8x32xf32>
    %111 = arith.mulf %102, %109 : vector<8x32xf32>
    %112 = arith.addf %110, %111 : vector<8x32xf32>
    %113 = math.tanh %112 : vector<8x32xf32>
    %114 = arith.mulf %104, %113 : vector<8x32xf32>
    %115 = arith.index_cast %92 : i32 to index
    %c0_42 = arith.constant 0 : index
    %116 = vector.load %arg13[%115, %c0_42] : memref<32x32xf32, #tpu.memory_space<vmem>>, vector<8x32xf32>
    tpu.vector_store %arg13[%115, %c0_42], %114 {strides = array<i32>} : memref<32x32xf32, #tpu.memory_space<vmem>>, vector<8x32xf32>,
    %c4_i32 = arith.constant 4 : i32
    %c0_43 = arith.constant 0 : index
    %c0_44 = arith.constant 0 : index
    %117 = vector.load %arg13[%c0_43, %c0_44] : memref<32x32xf32, #tpu.memory_space<vmem>>, vector<32x32xf32>
    %c0_45 = arith.constant 0 : index
    %c0_46 = arith.constant 0 : index
    %118 = vector.load %arg7[%c0_45, %c0_46] : memref<32x16xf32, #tpu.memory_space<vmem>>, vector<32x16xf32>
    %c0_47 = arith.constant 0 : index
    %c0_48 = arith.constant 0 : index
    %119 = vector.load %arg8[%c0_47, %c0_48] : memref<1x16xf32, #tpu.memory_space<vmem>>, vector<1x16xf32>
    %cst_49 = arith.constant dense<0.000000e+00> : vector<32x16xf32>
    %120 = tpu.matmul %117, %118, %cst_49 {dimension_numbers = #tpu.dot_dimension_numbers<[1], [0], [0], [1], [0, 0, 1, 1], [], []>} : vector<32x32xf32>, vector<32x16xf32>, vector<32x16xf32> -> vector<32x16xf32>
    %121 = vector.broadcast %119 : vector<1x16xf32> to vector<32x16xf32>
    %122 = arith.addf %120, %121 : vector<32x16xf32>
    %123 = arith.negf %122 : vector<32x16xf32>
    %124 = math.exp %123 : vector<32x16xf32>
    %cst_50 = arith.constant 1.000000e+00 : f32
    %125 = vector.broadcast %cst_50 : f32 to vector<32x16xf32>
    %126 = arith.addf %125, %124 : vector<32x16xf32>
    %127 = arith.divf %125, %126 : vector<32x16xf32>
    %c0_51 = arith.constant 0 : index
    %c0_52 = arith.constant 0 : index
    %128 = vector.load %arg9[%c0_51, %c0_52] : memref<16x8xf32, #tpu.memory_space<vmem>>, vector<16x8xf32>
    %c0_53 = arith.constant 0 : index
    %c0_54 = arith.constant 0 : index
    %129 = vector.load %arg10[%c0_53, %c0_54] : memref<1x8xf32, #tpu.memory_space<vmem>>, vector<1x8xf32>
    %cst_55 = arith.constant dense<0.000000e+00> : vector<32x8xf32>
    %130 = tpu.matmul %127, %128, %cst_55 {dimension_numbers = #tpu.dot_dimension_numbers<[1], [0], [0], [1], [0, 0, 1, 1], [], []>} : vector<32x16xf32>, vector<16x8xf32>, vector<32x8xf32> -> vector<32x8xf32>
    %131 = vector.broadcast %129 : vector<1x8xf32> to vector<32x8xf32>
    %132 = arith.addf %130, %131 : vector<32x8xf32>
    %133 = arith.negf %132 : vector<32x8xf32>
    %134 = math.exp %133 : vector<32x8xf32>
    %cst_56 = arith.constant 1.000000e+00 : f32
    %135 = vector.broadcast %cst_56 : f32 to vector<32x8xf32>
    %136 = arith.addf %135, %134 : vector<32x8xf32>
    %137 = arith.divf %135, %136 : vector<32x8xf32>
    %c0_57 = arith.constant 0 : index
    %c0_58 = arith.constant 0 : index
    %c0_59 = arith.constant 0 : index
    %138 = vector.load %arg11[%c0_57, %c0_58, %c0_59] : memref<1x32x8xf32, #tpu.memory_space<vmem>>, vector<1x32x8xf32>
    %139 = vector.shape_cast %138 : vector<1x32x8xf32> to vector<32x8xf32>
    %140 = vector.shape_cast %137 : vector<32x8xf32> to vector<1x32x8xf32>
    tpu.vector_store %arg11[%c0_57, %c0_58, %c0_59], %140 {strides = array<i32>} : memref<1x32x8xf32, #tpu.memory_space<vmem>>, vector<1x32x8xf32>,
    return
  }
  func.func @transform_0(%arg0: i32) -> (i32, i32, i32) {
    %c0_i32 = arith.constant 0 : i32
    %c0_i32_0 = arith.constant 0 : i32
    %c0_i32_1 = arith.constant 0 : i32
    return %arg0, %c0_i32, %c0_i32_0 : i32, i32, i32
  }
  func.func @transform_1(%arg0: i32) -> (i32, i32, i32) {
    %c0_i32 = arith.constant 0 : i32
    %c0_i32_0 = arith.constant 0 : i32
    %c0_i32_1 = arith.constant 0 : i32
    return %arg0, %c0_i32, %c0_i32_0 : i32, i32, i32
  }
  func.func @transform_2(%arg0: i32) -> (i32, i32, i32) {
    %c0_i32 = arith.constant 0 : i32
    %c0_i32_0 = arith.constant 0 : i32
    %c0_i32_1 = arith.constant 0 : i32
    return %arg0, %c0_i32, %c0_i32_0 : i32, i32, i32
  }
  func.func @transform_3(%arg0: i32) -> (i32, i32) {
    %c0_i32 = arith.constant 0 : i32
    %c0_i32_0 = arith.constant 0 : i32
    %c0_i32_1 = arith.constant 0 : i32
    return %c0_i32, %c0_i32_0 : i32, i32
  }
  func.func @transform_4(%arg0: i32) -> (i32, i32) {
    %c0_i32 = arith.constant 0 : i32
    %c0_i32_0 = arith.constant 0 : i32
    %c0_i32_1 = arith.constant 0 : i32
    return %c0_i32, %c0_i32_0 : i32, i32
  }
  func.func @transform_5(%arg0: i32) -> (i32, i32) {
    %c0_i32 = arith.constant 0 : i32
    %c0_i32_0 = arith.constant 0 : i32
    %c0_i32_1 = arith.constant 0 : i32
    return %c0_i32, %c0_i32_0 : i32, i32
  }
  func.func @transform_6(%arg0: i32) -> (i32, i32) {
    %c0_i32 = arith.constant 0 : i32
    %c0_i32_0 = arith.constant 0 : i32
    %c0_i32_1 = arith.constant 0 : i32
    return %c0_i32, %c0_i32_0 : i32, i32
  }
  func.func @transform_7(%arg0: i32) -> (i32, i32) {
    %c0_i32 = arith.constant 0 : i32
    %c0_i32_0 = arith.constant 0 : i32
    %c0_i32_1 = arith.constant 0 : i32
    return %c0_i32, %c0_i32_0 : i32, i32
  }
  func.func @transform_8(%arg0: i32) -> (i32, i32) {
    %c0_i32 = arith.constant 0 : i32
    %c0_i32_0 = arith.constant 0 : i32
    %c0_i32_1 = arith.constant 0 : i32
    return %c0_i32, %c0_i32_0 : i32, i32
  }
  func.func @transform_9(%arg0: i32) -> (i32, i32) {
    %c0_i32 = arith.constant 0 : i32
    %c0_i32_0 = arith.constant 0 : i32
    %c0_i32_1 = arith.constant 0 : i32
    return %c0_i32, %c0_i32_0 : i32, i32
  }
  func.func @transform_10(%arg0: i32) -> (i32, i32, i32) {
    %c0_i32 = arith.constant 0 : i32
    %c0_i32_0 = arith.constant 0 : i32
    %c0_i32_1 = arith.constant 0 : i32
    return %arg0, %c0_i32, %c0_i32_0 : i32, i32, i32
  }
}

</mosaic_0001>

<llo_original>
// kernel: forward.1
$region0: #{forward.1}
  #allocation0 [shape = 'u32[]', space=smem, size = 0x4, offset = 0x4, fixed_abs, tag = 'smem constant byte address 0x4 - core index']
  #allocation1 [shape = 'u32[144,128]{1,0:T(1,128)}', space=vmem, size = 0x12000, scoped, tag = 'internal scratch']
  #allocation2 [shape = 'f32[32,128]{1,0:T(8,128)}', space=vmem, size = 0x4000, scoped, tag = 'scratch operand']
  #allocation3 [shape = 'f32[32,32]{1,0:T(8,128)}', space=vmem, size = 0x4000, scoped, tag = 'scratch operand']
  %s0 = inlined_call_operand.vmem [shape: bf16[2,32,1120], index: 0, kind: input, shape index: {}]
  %s1 = inlined_call_operand.vmem [shape: f32[2,8,32], index: 1, kind: input, shape index: {}]
  %s2 = inlined_call_operand.vmem [shape: f32[2,8,32], index: 2, kind: input, shape index: {}]
  %s3 = inlined_call_operand.vmem [shape: bf16[1120,128], index: 3, kind: input, shape index: {}]
  %s4 = inlined_call_operand.vmem [shape: f32[32,128], index: 4, kind: input, shape index: {}]
  %s5 = inlined_call_operand.vmem [shape: f32[1,128], index: 5, kind: input, shape index: {}]
  %s6 = inlined_call_operand.vmem [shape: f32[32,16], index: 6, kind: input, shape index: {}]
  %s7 = inlined_call_operand.vmem [shape: f32[1,16], index: 7, kind: input, shape index: {}]
  %s8 = inlined_call_operand.vmem [shape: f32[16,8], index: 8, kind: input, shape index: {}]
  %s9 = inlined_call_operand.vmem [shape: f32[1,8], index: 9, kind: input, shape index: {}]
  %s10 = inlined_call_operand.vmem [shape: f32[2,32,8], index: 10, kind: output, shape index: {}]
  %s11 = sld [smem:[#allocation0]]
  $region73: #{forward.1} parent=0
    _
  %s13 = ssub.s32 1, %s11
  %s14 = scalar_select 0, %s13, %s11
  loop: start=0, step=1, limit=4
  $region2: #{forward.1} parent=0 // loop_pre_header
    _
  $region3: #{forward.1} parent=0 // loop_header
    %s16 = sphi 0, %s20
    %p17 = scmp.ge.s32.totalorder %s16, 4
    %s26 = sphi 0, %s28
    %s29 = sphi 0, %s26
    %s30 = sphi 0, %s29
    %s46 = sphi 0, %s30
    %s52 = sphi 0, %s54
    %s55 = sphi 0, %s52
    %s56 = sphi 0, %s55
    %s72 = sphi 0, %s56
    %s78 = sphi 0, %s80
    %s81 = sphi 0, %s78
    %s82 = sphi 0, %s81
    %s98 = sphi 0, %s82
    %s102 = sphi 0, %s102
    %s104 = sphi 0, %s102
    %s105 = sphi 0, %s104
    %s119 = sphi 0, %s105
    %s123 = sphi 0, %s123
    %s125 = sphi 0, %s123
    %s126 = sphi 0, %s125
    %s140 = sphi 0, %s126
    %s144 = sphi 0, %s144
    %s146 = sphi 0, %s144
    %s147 = sphi 0, %s146
    %s161 = sphi 0, %s147
    %s165 = sphi 0, %s165
    %s167 = sphi 0, %s165
    %s168 = sphi 0, %s167
    %s182 = sphi 0, %s168
    %s186 = sphi 0, %s186
    %s188 = sphi 0, %s186
    %s189 = sphi 0, %s188
    %s203 = sphi 0, %s189
    %s207 = sphi 0, %s207
    %s209 = sphi 0, %s207
    %s210 = sphi 0, %s209
    %s224 = sphi 0, %s210
    %s228 = sphi 0, %s228
    %s230 = sphi 0, %s228
    %s231 = sphi 0, %s230
    %s245 = sphi 0, %s231
    %s251 = sphi 0, %s253
    %s254 = sphi 0, %s251
    %s255 = sphi 0, %s254
    %s271 = sphi 0, %s255
  $region4: #{forward.1} parent=0 // loop_header_branch
    %19 = sbr.rel (%p17) target = $region8
  $region5: #{forward.1} parent=0 // loop_body
    %s21 = ssub.s32 %s16, 1
    %s22 = ssub.s32 %s16, 2
    %s23 = sadd.s32 %s16, 1
    %s24 = ssub.s32 %s16, %s23
    %p25 = scmp.eq.s32.totalorder %s24, 0
    %s27 = sadd.s32 %s26, 1
    %s28 = scalar_select %p25, %s26, %s27
    %p31 = pneg %p25
    %p32 = scmp.eq.s32.totalorder %s16, 1
    %p33 = por %p31, %p32
    %p34 = scmp.ne.s32.totalorder %s26, %s29
    %p35 = scmp.eq.s32.totalorder %s16, 0
    %p36 = por %p34, %p35
    %p37 = scmp.ne.s32.totalorder %s26, %s29
    %p38 = scmp.eq.s32.totalorder %s21, 1
    %p39 = por %p37, %p38
    %p40 = scmp.ne.s32.totalorder %s29, %s30
    %p41 = scmp.eq.s32.totalorder %s21, 0
    %p42 = por %p40, %p41
    %p43 = scmp.ne.s32.totalorder %s29, %s30
    %p44 = scmp.eq.s32.totalorder %s22, 1
    %p45 = por %p43, %p44
    %p47 = scmp.ne.s32.totalorder %s30, %s46
    %p48 = scmp.eq.s32.totalorder %s22, 0
    %p49 = por %p47, %p48
    %s50 = ssub.s32 %s16, %s23
    %p51 = scmp.eq.s32.totalorder %s50, 0
    %s53 = sadd.s32 %s52, 1
    %s54 = scalar_select %p51, %s52, %s53
    %p57 = pneg %p51
    %p58 = scmp.eq.s32.totalorder %s16, 1
    %p59 = por %p57, %p58
    %p60 = scmp.ne.s32.totalorder %s52, %s55
    %p61 = scmp.eq.s32.totalorder %s16, 0
    %p62 = por %p60, %p61
    %p63 = scmp.ne.s32.totalorder %s52, %s55
    %p64 = scmp.eq.s32.totalorder %s21, 1
    %p65 = por %p63, %p64
    %p66 = scmp.ne.s32.totalorder %s55, %s56
    %p67 = scmp.eq.s32.totalorder %s21, 0
    %p68 = por %p66, %p67
    %p69 = scmp.ne.s32.totalorder %s55, %s56
    %p70 = scmp.eq.s32.totalorder %s22, 1
    %p71 = por %p69, %p70
    %p73 = scmp.ne.s32.totalorder %s56, %s72
    %p74 = scmp.eq.s32.totalorder %s22, 0
    %p75 = por %p73, %p74
    %s76 = ssub.s32 %s16, %s23
    %p77 = scmp.eq.s32.totalorder %s76, 0
    %s79 = sadd.s32 %s78, 1
    %s80 = scalar_select %p77, %s78, %s79
    %p83 = pneg %p77
    %p84 = scmp.eq.s32.totalorder %s16, 1
    %p85 = por %p83, %p84
    %p86 = scmp.ne.s32.totalorder %s78, %s81
    %p87 = scmp.eq.s32.totalorder %s16, 0
    %p88 = por %p86, %p87
    %p89 = scmp.ne.s32.totalorder %s78, %s81
    %p90 = scmp.eq.s32.totalorder %s21, 1
    %p91 = por %p89, %p90
    %p92 = scmp.ne.s32.totalorder %s81, %s82
    %p93 = scmp.eq.s32.totalorder %s21, 0
    %p94 = por %p92, %p93
    %p95 = scmp.ne.s32.totalorder %s81, %s82
    %p96 = scmp.eq.s32.totalorder %s22, 1
    %p97 = por %p95, %p96
    %p99 = scmp.ne.s32.totalorder %s82, %s98
    %p100 = scmp.eq.s32.totalorder %s22, 0
    %p101 = por %p99, %p100
    %s103 = sadd.s32 %s102, 1
    %p106 = scmp.eq.s32.totalorder %s16, 1
    %p107 = scmp.ne.s32.totalorder %s102, %s104
    %p108 = scmp.eq.s32.totalorder %s16, 0
    %p109 = por %p107, %p108
    %p110 = scmp.ne.s32.totalorder %s102, %s104
    %p111 = scmp.eq.s32.totalorder %s21, 1
    %p112 = por %p110, %p111
    %p113 = scmp.ne.s32.totalorder %s104, %s105
    %p114 = scmp.eq.s32.totalorder %s21, 0
    %p115 = por %p113, %p114
    %p116 = scmp.ne.s32.totalorder %s104, %s105
    %p117 = scmp.eq.s32.totalorder %s22, 1
    %p118 = por %p116, %p117
    %p120 = scmp.ne.s32.totalorder %s105, %s119
    %p121 = scmp.eq.s32.totalorder %s22, 0
    %p122 = por %p120, %p121
    %s124 = sadd.s32 %s123, 1
    %p127 = scmp.eq.s32.totalorder %s16, 1
    %p128 = scmp.ne.s32.totalorder %s123, %s125
    %p129 = scmp.eq.s32.totalorder %s16, 0
    %p130 = por %p128, %p129
    %p131 = scmp.ne.s32.totalorder %s123, %s125
    %p132 = scmp.eq.s32.totalorder %s21, 1
    %p133 = por %p131, %p132
    %p134 = scmp.ne.s32.totalorder %s125, %s126
    %p135 = scmp.eq.s32.totalorder %s21, 0
    %p136 = por %p134, %p135
    %p137 = scmp.ne.s32.totalorder %s125, %s126
    %p138 = scmp.eq.s32.totalorder %s22, 1
    %p139 = por %p137, %p138
    %p141 = scmp.ne.s32.totalorder %s126, %s140
    %p142 = scmp.eq.s32.totalorder %s22, 0
    %p143 = por %p141, %p142
    %s145 = sadd.s32 %s144, 1
    %p148 = scmp.eq.s32.totalorder %s16, 1
    %p149 = scmp.ne.s32.totalorder %s144, %s146
    %p150 = scmp.eq.s32.totalorder %s16, 0
    %p151 = por %p149, %p150
    %p152 = scmp.ne.s32.totalorder %s144, %s146
    %p153 = scmp.eq.s32.totalorder %s21, 1
    %p154 = por %p152, %p153
    %p155 = scmp.ne.s32.totalorder %s146, %s147
    %p156 = scmp.eq.s32.totalorder %s21, 0
    %p157 = por %p155, %p156
    %p158 = scmp.ne.s32.totalorder %s146, %s147
    %p159 = scmp.eq.s32.totalorder %s22, 1
    %p160 = por %p158, %p159
    %p162 = scmp.ne.s32.totalorder %s147, %s161
    %p163 = scmp.eq.s32.totalorder %s22, 0
    %p164 = por %p162, %p163
    %s166 = sadd.s32 %s165, 1
    %p169 = scmp.eq.s32.totalorder %s16, 1
    %p170 = scmp.ne.s32.totalorder %s165, %s167
    %p171 = scmp.eq.s32.totalorder %s16, 0
    %p172 = por %p170, %p171
    %p173 = scmp.ne.s32.totalorder %s165, %s167
    %p174 = scmp.eq.s32.totalorder %s21, 1
    %p175 = por %p173, %p174
    %p176 = scmp.ne.s32.totalorder %s167, %s168
    %p177 = scmp.eq.s32.totalorder %s21, 0
    %p178 = por %p176, %p177
    %p179 = scmp.ne.s32.totalorder %s167, %s168
    %p180 = scmp.eq.s32.totalorder %s22, 1
    %p181 = por %p179, %p180
    %p183 = scmp.ne.s32.totalorder %s168, %s182
    %p184 = scmp.eq.s32.totalorder %s22, 0
    %p185 = por %p183, %p184
    %s187 = sadd.s32 %s186, 1
    %p190 = scmp.eq.s32.totalorder %s16, 1
    %p191 = scmp.ne.s32.totalorder %s186, %s188
    %p192 = scmp.eq.s32.totalorder %s16, 0
    %p193 = por %p191, %p192
    %p194 = scmp.ne.s32.totalorder %s186, %s188
    %p195 = scmp.eq.s32.totalorder %s21, 1
    %p196 = por %p194, %p195
    %p197 = scmp.ne.s32.totalorder %s188, %s189
    %p198 = scmp.eq.s32.totalorder %s21, 0
    %p199 = por %p197, %p198
    %p200 = scmp.ne.s32.totalorder %s188, %s189
    %p201 = scmp.eq.s32.totalorder %s22, 1
    %p202 = por %p200, %p201
    %p204 = scmp.ne.s32.totalorder %s189, %s203
    %p205 = scmp.eq.s32.totalorder %s22, 0
    %p206 = por %p204, %p205
    %s208 = sadd.s32 %s207, 1
    %p211 = scmp.eq.s32.totalorder %s16, 1
    %p212 = scmp.ne.s32.totalorder %s207, %s209
    %p213 = scmp.eq.s32.totalorder %s16, 0
    %p214 = por %p212, %p213
    %p215 = scmp.ne.s32.totalorder %s207, %s209
    %p216 = scmp.eq.s32.totalorder %s21, 1
    %p217 = por %p215, %p216
    %p218 = scmp.ne.s32.totalorder %s209, %s210
    %p219 = scmp.eq.s32.totalorder %s21, 0
    %p220 = por %p218, %p219
    %p221 = scmp.ne.s32.totalorder %s209, %s210
    %p222 = scmp.eq.s32.totalorder %s22, 1
    %p223 = por %p221, %p222
    %p225 = scmp.ne.s32.totalorder %s210, %s224
    %p226 = scmp.eq.s32.totalorder %s22, 0
    %p227 = por %p225, %p226
    %s229 = sadd.s32 %s228, 1
    %p232 = scmp.eq.s32.totalorder %s16, 1
    %p233 = scmp.ne.s32.totalorder %s228, %s230
    %p234 = scmp.eq.s32.totalorder %s16, 0
    %p235 = por %p233, %p234
    %p236 = scmp.ne.s32.totalorder %s228, %s230
    %p237 = scmp.eq.s32.totalorder %s21, 1
    %p238 = por %p236, %p237
    %p239 = scmp.ne.s32.totalorder %s230, %s231
    %p240 = scmp.eq.s32.totalorder %s21, 0
    %p241 = por %p239, %p240
    %p242 = scmp.ne.s32.totalorder %s230, %s231
    %p243 = scmp.eq.s32.totalorder %s22, 1
    %p244 = por %p242, %p243
    %p246 = scmp.ne.s32.totalorder %s231, %s245
    %p247 = scmp.eq.s32.totalorder %s22, 0
    %p248 = por %p246, %p247
    %s249 = ssub.s32 %s16, %s23
    %p250 = scmp.eq.s32.totalorder %s249, 0
    %s252 = sadd.s32 %s251, 1
    %s253 = scalar_select %p250, %s251, %s252
    %p256 = pneg %p250
    %p257 = scmp.eq.s32.totalorder %s16, 1
    %p258 = por %p256, %p257
    %p259 = scmp.ne.s32.totalorder %s251, %s254
    %p260 = scmp.eq.s32.totalorder %s16, 0
    %p261 = por %p259, %p260
    %p262 = scmp.ne.s32.totalorder %s251, %s254
    %p263 = scmp.eq.s32.totalorder %s21, 1
    %p264 = por %p262, %p263
    %p265 = scmp.ne.s32.totalorder %s254, %s255
    %p266 = scmp.eq.s32.totalorder %s21, 0
    %p267 = por %p265, %p266
    %p268 = scmp.ne.s32.totalorder %s254, %s255
    %p269 = scmp.eq.s32.totalorder %s22, 1
    %p270 = por %p268, %p269
    %p272 = scmp.ne.s32.totalorder %s255, %s271
    %p273 = scmp.eq.s32.totalorder %s22, 0
    %p274 = por %p272, %p273
    %p275 = scmp.le.s32.totalorder 1, %s16
    %p276 = scmp.lt.s32.totalorder %s16, 3
    %p277 = pnand %p275, %p276
    %p278 = pneg %p277
    // Predicated region
    $region9: #{forward.1} parent=5 // pred_check
      _
    $region10: #{forward.1} parent=5 // pred_check_branch
      %280 = sbr.rel (%p277) target = $region12
    $region11: #{forward.1} parent=5 // pred_region
      %s281 = ssub.s32 %s16, 1
      // Predicated region
      $region13: #{forward.1} parent=11 // pred_check
        %p282 = pneg %p115
      $region14: #{forward.1} parent=11 // pred_check_branch
        %284 = sbr.rel (%p282) target = $region16
      $region15: #{forward.1} parent=11 // pred_region
        _
      $region16: #{forward.1} parent=11 // pred_fallthru
        _
      // Predicated region
      $region17: #{forward.1} parent=11 // pred_check
        %p285 = pneg %p136
      $region18: #{forward.1} parent=11 // pred_check_branch
        %287 = sbr.rel (%p285) target = $region20
      $region19: #{forward.1} parent=11 // pred_region
        _
      $region20: #{forward.1} parent=11 // pred_fallthru
        _
      // Predicated region
      $region21: #{forward.1} parent=11 // pred_check
        %p288 = pneg %p157
      $region22: #{forward.1} parent=11 // pred_check_branch
        %290 = sbr.rel (%p288) target = $region24
      $region23: #{forward.1} parent=11 // pred_region
        _
      $region24: #{forward.1} parent=11 // pred_fallthru
        _
      // Predicated region
      $region25: #{forward.1} parent=11 // pred_check
        %p291 = pneg %p178
      $region26: #{forward.1} parent=11 // pred_check_branch
        %293 = sbr.rel (%p291) target = $region28
      $region27: #{forward.1} parent=11 // pred_region
        _
      $region28: #{forward.1} parent=11 // pred_fallthru
        _
      // Predicated region
      $region29: #{forward.1} parent=11 // pred_check
        %p294 = pneg %p199
      $region30: #{forward.1} parent=11 // pred_check_branch
        %296 = sbr.rel (%p294) target = $region32
      $region31: #{forward.1} parent=11 // pred_region
        _
      $region32: #{forward.1} parent=11 // pred_fallthru
        _
      // Predicated region
      $region33: #{forward.1} parent=11 // pred_check
        %p297 = pneg %p220
      $region34: #{forward.1} parent=11 // pred_check_branch
        %299 = sbr.rel (%p297) target = $region36
      $region35: #{forward.1} parent=11 // pred_region
        _
      $region36: #{forward.1} parent=11 // pred_fallthru
        _
      // Predicated region
      $region37: #{forward.1} parent=11 // pred_check
        %p300 = pneg %p241
      $region38: #{forward.1} parent=11 // pred_check_branch
        %302 = sbr.rel (%p300) target = $region40
      $region39: #{forward.1} parent=11 // pred_region
        _
      $region40: #{forward.1} parent=11 // pred_fallthru
        _
    $region12: #{forward.1} parent=5 // pred_fallthru
      _
    %p303 = scmp.lt.s32.totalorder %s16, 2
    // Predicated region
    $region41: #{forward.1} parent=5 // pred_check
      %p304 = pneg %p303
    $region42: #{forward.1} parent=5 // pred_check_branch
      %306 = sbr.rel (%p304) target = $region44
    $region43: #{forward.1} parent=5 // pred_region
      // Predicated region
      $region45: #{forward.1} parent=43 // pred_check
        %p307 = pneg %p36
      $region46: #{forward.1} parent=43 // pred_check_branch
        %309 = sbr.rel (%p307) target = $region48
      $region47: #{forward.1} parent=43 // pred_region
        %p310 = scmp.lt.s32.totalorder %s16, 1
        %s311 = scalar_select %p310, %s16, 1
        %s312 = smul.addr %s311, 36
        %s313 = smul.addr %s312, 4
        %s314 = scalar_lea.vmem %s0, %s313
      $region48: #{forward.1} parent=43 // pred_fallthru
        _
      // Predicated region
      $region49: #{forward.1} parent=43 // pred_check
        %p315 = pneg %p62
      $region50: #{forward.1} parent=43 // pred_check_branch
        %317 = sbr.rel (%p315) target = $region52
      $region51: #{forward.1} parent=43 // pred_region
        %p318 = scmp.lt.s32.totalorder %s16, 1
        %s319 = scalar_select %p318, %s16, 1
        %s320 = smul.addr %s319, 8
        %s321 = scalar_lea.vmem %s1, %s320
      $region52: #{forward.1} parent=43 // pred_fallthru
        _
      // Predicated region
      $region53: #{forward.1} parent=43 // pred_check
        %p322 = pneg %p88
      $region54: #{forward.1} parent=43 // pred_check_branch
        %324 = sbr.rel (%p322) target = $region56
      $region55: #{forward.1} parent=43 // pred_region
        %p325 = scmp.lt.s32.totalorder %s16, 1
        %s326 = scalar_select %p325, %s16, 1
        %s327 = smul.addr %s326, 8
        %s328 = scalar_lea.vmem %s2, %s327
      $region56: #{forward.1} parent=43 // pred_fallthru
        _
    $region44: #{forward.1} parent=5 // pred_fallthru
      _
    %p329 = scmp.le.s32.totalorder 1, %s16
    %p330 = scmp.lt.s32.totalorder %s16, 3
    %p331 = pnand %p329, %p330
    %p332 = pneg %p331
    // Predicated region
    $region57: #{forward.1} parent=5 // pred_check
      _
    $region58: #{forward.1} parent=5 // pred_check_branch
      %334 = sbr.rel (%p331) target = $region60
    $region59: #{forward.1} parent=5 // pred_region
      %s335 = ssub.s32 %s16, 1
      %p336 = scmp.lt.s32.totalorder %s21, 1
      %s337 = scalar_select %p336, %s21, 1
      %s338 = smul.addr %s337, 36
      %s339 = smul.addr %s338, 4
      %s340 = scalar_lea.vmem %s0, %s339
      %p341 = pneg %p42
      %p342 = pneg %p39
      %p343 = scmp.lt.s32.totalorder %s21, 1
      %s344 = scalar_select %p343, %s21, 1
      %s345 = smul.addr %s344, 8
      %s346 = scalar_lea.vmem %s1, %s345
      %p347 = pneg %p68
      %p348 = pneg %p65
      %p349 = scmp.lt.s32.totalorder %s21, 1
      %s350 = scalar_select %p349, %s21, 1
      %s351 = smul.addr %s350, 8
      %s352 = scalar_lea.vmem %s2, %s351
      %p353 = pneg %p94
      %p354 = pneg %p91
      %p355 = pneg %p115
      %p356 = pneg %p112
      %p357 = pneg %p136
      %p358 = pneg %p133
      %p359 = pneg %p157
      %p360 = pneg %p154
      %p361 = pneg %p178
      %p362 = pneg %p175
      %p363 = pneg %p199
      %p364 = pneg %p196
      %p365 = pneg %p220
      %p366 = pneg %p217
      %p367 = pneg %p241
      %p368 = pneg %p238
      %p369 = pneg %p267
      %p370 = pneg %p264
      %p371 = scmp.lt.s32.totalorder %s21, 1
      %s372 = scalar_select %p371, %s21, 1
      %s373 = smul.addr %s372, 4
      %s374 = smul.addr %s373, 8
      %s375 = scalar_lea.vmem %s10, %s374
      %p376 = scmp.lt.s32.totalorder %s21, 1
      %s377 = scalar_select %p376, %s21, 1
      %s378 = smul.addr %s377, 36
      %s379 = smul.addr %s378, 4
      %s380 = scalar_lea.vmem %s0, %s379
      %p381 = scmp.lt.s32.totalorder %s21, 1
      %s382 = scalar_select %p381, %s21, 1
      %s383 = smul.addr %s382, 8
      %s384 = scalar_lea.vmem %s1, %s383
      %p385 = scmp.lt.s32.totalorder %s21, 1
      %s386 = scalar_select %p385, %s21, 1
      %s387 = smul.addr %s386, 8
      %s388 = scalar_lea.vmem %s2, %s387
      %p389 = scmp.lt.s32.totalorder %s21, 1
      %s390 = scalar_select %p389, %s21, 1
      %s391 = smul.addr %s390, 4
      %s392 = smul.addr %s391, 8
      %s393 = scalar_lea.vmem %s10, %s392
      %v395 = vld [vmem:[%s380] sm:$0xff]
      %v396 = vld [vmem:[%s380 + $0x8] sm:$0xff]
      %v397 = vld [vmem:[%s380 + $0x10] sm:$0xff]
      %v398 = vld [vmem:[%s380 + $0x18] sm:$0xff]
      %v399 = vld [vmem:[%s380 + $0x20] sm:$0xf]
      %v400 = vld [vmem:[%s380 + $0x24] sm:$0xff]
      %v401 = vld [vmem:[%s380 + $0x2c] sm:$0xff]
      %v402 = vld [vmem:[%s380 + $0x34] sm:$0xff]
      %v403 = vld [vmem:[%s380 + $0x3c] sm:$0xff]
      %v404 = vld [vmem:[%s380 + $0x44] sm:$0xf]
      %v405 = vld [vmem:[%s380 + $0x48] sm:$0xff]
      %v406 = vld [vmem:[%s380 + $0x50] sm:$0xff]
      %v407 = vld [vmem:[%s380 + $0x58] sm:$0xff]
      %v408 = vld [vmem:[%s380 + $0x60] sm:$0xff]
      %v409 = vld [vmem:[%s380 + $0x68] sm:$0xf]
      %v410 = vld [vmem:[%s380 + $0x6c] sm:$0xff]
      %v411 = vld [vmem:[%s380 + $0x74] sm:$0xff]
      %v412 = vld [vmem:[%s380 + $0x7c] sm:$0xff]
      %v413 = vld [vmem:[%s380 + $0x84] sm:$0xff]
      %v414 = vld [vmem:[%s380 + $0x8c] sm:$0xf]
      %v415 = vld [vmem:[%s3] sm:$0xf]
      %v416 = vld [vmem:[%s3 + $0x4] sm:$0xf]
      %v417 = vld [vmem:[%s3 + $0x8] sm:$0xf]
      %v418 = vld [vmem:[%s3 + $0xc] sm:$0xf]
      %v419 = vld [vmem:[%s3 + $0x10] sm:$0xf]
      %v420 = vld [vmem:[%s3 + $0x14] sm:$0xf]
      %v421 = vld [vmem:[%s3 + $0x18] sm:$0xf]
      %v422 = vld [vmem:[%s3 + $0x1c] sm:$0xf]
      %v423 = vld [vmem:[%s3 + $0x20] sm:$0xf]
      %v424 = vld [vmem:[%s3 + $0x24] sm:$0xf]
      %v425 = vld [vmem:[%s3 + $0x28] sm:$0xf]
      %v426 = vld [vmem:[%s3 + $0x2c] sm:$0xf]
      %v427 = vld [vmem:[%s3 + $0x30] sm:$0xf]
      %v428 = vld [vmem:[%s3 + $0x34] sm:$0xf]
      %v429 = vld [vmem:[%s3 + $0x38] sm:$0xf]
      %v430 = vld [vmem:[%s3 + $0x3c] sm:$0xf]
      %v431 = vld [vmem:[%s3 + $0x40] sm:$0xf]
      %v432 = vld [vmem:[%s3 + $0x44] sm:$0xf]
      %v433 = vld [vmem:[%s3 + $0x48] sm:$0xf]
      %v434 = vld [vmem:[%s3 + $0x4c] sm:$0xf]
      %v435 = vld [vmem:[%s3 + $0x50] sm:$0xf]
      %v436 = vld [vmem:[%s3 + $0x54] sm:$0xf]
      %v437 = vld [vmem:[%s3 + $0x58] sm:$0xf]
      %v438 = vld [vmem:[%s3 + $0x5c] sm:$0xf]
      %v439 = vld [vmem:[%s3 + $0x60] sm:$0xf]
      %v440 = vld [vmem:[%s3 + $0x64] sm:$0xf]
      %v441 = vld [vmem:[%s3 + $0x68] sm:$0xf]
      %v442 = vld [vmem:[%s3 + $0x6c] sm:$0xf]
      %v443 = vld [vmem:[%s3 + $0x70] sm:$0xf]
      %v444 = vld [vmem:[%s3 + $0x74] sm:$0xf]
      %v445 = vld [vmem:[%s3 + $0x78] sm:$0xf]
      %v446 = vld [vmem:[%s3 + $0x7c] sm:$0xf]
      %v447 = vld [vmem:[%s3 + $0x80] sm:$0xf]
      %v448 = vld [vmem:[%s3 + $0x84] sm:$0xf]
      %v449 = vld [vmem:[%s3 + $0x88] sm:$0xf]
      %v450 = vld [vmem:[%s3 + $0x8c] sm:$0xf]
      %v451 = vld [vmem:[%s3 + $0x90] sm:$0xf]
      %v452 = vld [vmem:[%s3 + $0x94] sm:$0xf]
      %v453 = vld [vmem:[%s3 + $0x98] sm:$0xf]
      %v454 = vld [vmem:[%s3 + $0x9c] sm:$0xf]
      %v455 = vld [vmem:[%s3 + $0xa0] sm:$0xf]
      %v456 = vld [vmem:[%s3 + $0xa4] sm:$0xf]
      %v457 = vld [vmem:[%s3 + $0xa8] sm:$0xf]
      %v458 = vld [vmem:[%s3 + $0xac] sm:$0xf]
      %v459 = vld [vmem:[%s3 + $0xb0] sm:$0xf]
      %v460 = vld [vmem:[%s3 + $0xb4] sm:$0xf]
      %v461 = vld [vmem:[%s3 + $0xb8] sm:$0xf]
      %v462 = vld [vmem:[%s3 + $0xbc] sm:$0xf]
      %v463 = vld [vmem:[%s3 + $0xc0] sm:$0xf]
      %v464 = vld [vmem:[%s3 + $0xc4] sm:$0xf]
      %v465 = vld [vmem:[%s3 + $0xc8] sm:$0xf]
      %v466 = vld [vmem:[%s3 + $0xcc] sm:$0xf]
      %v467 = vld [vmem:[%s3 + $0xd0] sm:$0xf]
      %v468 = vld [vmem:[%s3 + $0xd4] sm:$0xf]
      %v469 = vld [vmem:[%s3 + $0xd8] sm:$0xf]
      %v470 = vld [vmem:[%s3 + $0xdc] sm:$0xf]
      %v471 = vld [vmem:[%s3 + $0xe0] sm:$0xf]
      %v472 = vld [vmem:[%s3 + $0xe4] sm:$0xf]
      %v473 = vld [vmem:[%s3 + $0xe8] sm:$0xf]
      %v474 = vld [vmem:[%s3 + $0xec] sm:$0xf]
      %v475 = vld [vmem:[%s3 + $0xf0] sm:$0xf]
      %v476 = vld [vmem:[%s3 + $0xf4] sm:$0xf]
      %v477 = vld [vmem:[%s3 + $0xf8] sm:$0xf]
      %v478 = vld [vmem:[%s3 + $0xfc] sm:$0xf]
      %v479 = vld [vmem:[%s3 + $0x100] sm:$0xf]
      %v480 = vld [vmem:[%s3 + $0x104] sm:$0xf]
      %v481 = vld [vmem:[%s3 + $0x108] sm:$0xf]
      %v482 = vld [vmem:[%s3 + $0x10c] sm:$0xf]
      %v483 = vld [vmem:[%s3 + $0x110] sm:$0xf]
      %v484 = vld [vmem:[%s3 + $0x114] sm:$0xf]
      %v485 = vld [vmem:[%s3 + $0x118] sm:$0xf]
      %v486 = vld [vmem:[%s3 + $0x11c] sm:$0xf]
      %v487 = vld [vmem:[%s3 + $0x120] sm:$0xf]
      %v488 = vld [vmem:[%s3 + $0x124] sm:$0xf]
      %v489 = vld [vmem:[%s3 + $0x128] sm:$0xf]
      %v490 = vld [vmem:[%s3 + $0x12c] sm:$0xf]
      %v491 = vld [vmem:[%s3 + $0x130] sm:$0xf]
      %v492 = vld [vmem:[%s3 + $0x134] sm:$0xf]
      %v493 = vld [vmem:[%s3 + $0x138] sm:$0xf]
      %v494 = vld [vmem:[%s3 + $0x13c] sm:$0xf]
      %v495 = vld [vmem:[%s3 + $0x140] sm:$0xf]
      %v496 = vld [vmem:[%s3 + $0x144] sm:$0xf]
      %v497 = vld [vmem:[%s3 + $0x148] sm:$0xf]
      %v498 = vld [vmem:[%s3 + $0x14c] sm:$0xf]
      %v499 = vld [vmem:[%s3 + $0x150] sm:$0xf]
      %v500 = vld [vmem:[%s3 + $0x154] sm:$0xf]
      %v501 = vld [vmem:[%s3 + $0x158] sm:$0xf]
      %v502 = vld [vmem:[%s3 + $0x15c] sm:$0xf]
      %v503 = vld [vmem:[%s3 + $0x160] sm:$0xf]
      %v504 = vld [vmem:[%s3 + $0x164] sm:$0xf]
      %v505 = vld [vmem:[%s3 + $0x168] sm:$0xf]
      %v506 = vld [vmem:[%s3 + $0x16c] sm:$0xf]
      %v507 = vld [vmem:[%s3 + $0x170] sm:$0xf]
      %v508 = vld [vmem:[%s3 + $0x174] sm:$0xf]
      %v509 = vld [vmem:[%s3 + $0x178] sm:$0xf]
      %v510 = vld [vmem:[%s3 + $0x17c] sm:$0xf]
      %v511 = vld [vmem:[%s3 + $0x180] sm:$0xf]
      %v512 = vld [vmem:[%s3 + $0x184] sm:$0xf]
      %v513 = vld [vmem:[%s3 + $0x188] sm:$0xf]
      %v514 = vld [vmem:[%s3 + $0x18c] sm:$0xf]
      %v515 = vld [vmem:[%s3 + $0x190] sm:$0xf]
      %v516 = vld [vmem:[%s3 + $0x194] sm:$0xf]
      %v517 = vld [vmem:[%s3 + $0x198] sm:$0xf]
      %v518 = vld [vmem:[%s3 + $0x19c] sm:$0xf]
      %v519 = vld [vmem:[%s3 + $0x1a0] sm:$0xf]
      %v520 = vld [vmem:[%s3 + $0x1a4] sm:$0xf]
      %v521 = vld [vmem:[%s3 + $0x1a8] sm:$0xf]
      %v522 = vld [vmem:[%s3 + $0x1ac] sm:$0xf]
      %v523 = vld [vmem:[%s3 + $0x1b0] sm:$0xf]
      %v524 = vld [vmem:[%s3 + $0x1b4] sm:$0xf]
      %v525 = vld [vmem:[%s3 + $0x1b8] sm:$0xf]
      %v526 = vld [vmem:[%s3 + $0x1bc] sm:$0xf]
      %v527 = vld [vmem:[%s3 + $0x1c0] sm:$0xf]
      %v528 = vld [vmem:[%s3 + $0x1c4] sm:$0xf]
      %v529 = vld [vmem:[%s3 + $0x1c8] sm:$0xf]
      %v530 = vld [vmem:[%s3 + $0x1cc] sm:$0xf]
      %v531 = vld [vmem:[%s3 + $0x1d0] sm:$0xf]
      %v532 = vld [vmem:[%s3 + $0x1d4] sm:$0xf]
      %v533 = vld [vmem:[%s3 + $0x1d8] sm:$0xf]
      %v534 = vld [vmem:[%s3 + $0x1dc] sm:$0xf]
      %v535 = vld [vmem:[%s3 + $0x1e0] sm:$0xf]
      %v536 = vld [vmem:[%s3 + $0x1e4] sm:$0xf]
      %v537 = vld [vmem:[%s3 + $0x1e8] sm:$0xf]
      %v538 = vld [vmem:[%s3 + $0x1ec] sm:$0xf]
      %v539 = vld [vmem:[%s3 + $0x1f0] sm:$0xf]
      %v540 = vld [vmem:[%s3 + $0x1f4] sm:$0xf]
      %v541 = vld [vmem:[%s3 + $0x1f8] sm:$0xf]
      %v542 = vld [vmem:[%s3 + $0x1fc] sm:$0xf]
      %v543 = vld [vmem:[%s3 + $0x200] sm:$0xf]
      %v544 = vld [vmem:[%s3 + $0x204] sm:$0xf]
      %v545 = vld [vmem:[%s3 + $0x208] sm:$0xf]
      %v546 = vld [vmem:[%s3 + $0x20c] sm:$0xf]
      %v547 = vld [vmem:[%s3 + $0x210] sm:$0xf]
      %v548 = vld [vmem:[%s3 + $0x214] sm:$0xf]
      %v549 = vld [vmem:[%s3 + $0x218] sm:$0xf]
      %v550 = vld [vmem:[%s3 + $0x21c] sm:$0xf]
      %v551 = vld [vmem:[%s3 + $0x220] sm:$0xf]
      %v552 = vld [vmem:[%s3 + $0x224] sm:$0xf]
      %v553 = vld [vmem:[%s3 + $0x228] sm:$0xf]
      %v554 = vld [vmem:[%s3 + $0x22c] sm:$0xf]
      %v555 = vld [vmem:[%s5] sm:$0x1]
      %v557 = vlaneseq
      %v558 = vshrl.u32 %v557, 7
      %v559 = vsub.s32 0, %v558
      %v560 = vrot.slane %v555, %v559
      %v582 = vunpack.c.l.b16 %v395
      %v583 = vunpack.c.h.b16 %v395
      %v584 = vunpack.c.l.b16 %v396
      %v585 = vunpack.c.h.b16 %v396
      %v586 = vunpack.c.l.b16 %v397
      %v587 = vunpack.c.h.b16 %v397
      %v588 = vunpack.c.l.b16 %v398
      %v589 = vunpack.c.h.b16 %v398
      %v590 = vunpack.c.l.b16 %v399
      %v591 = vunpack.c.l.b16 %v400
      %v592 = vunpack.c.h.b16 %v400
      %v593 = vunpack.c.l.b16 %v401
      %v594 = vunpack.c.h.b16 %v401
      %v595 = vunpack.c.l.b16 %v402
      %v596 = vunpack.c.h.b16 %v402
      %v597 = vunpack.c.l.b16 %v403
      %v598 = vunpack.c.h.b16 %v403
      %v599 = vunpack.c.l.b16 %v404
      %v600 = vunpack.c.l.b16 %v405
      %v601 = vunpack.c.h.b16 %v405
      %v602 = vunpack.c.l.b16 %v406
      %v603 = vunpack.c.h.b16 %v406
      %v604 = vunpack.c.l.b16 %v407
      %v605 = vunpack.c.h.b16 %v407
      %v606 = vunpack.c.l.b16 %v408
      %v607 = vunpack.c.h.b16 %v408
      %v608 = vunpack.c.l.b16 %v409
      %v609 = vunpack.c.l.b16 %v410
      %v610 = vunpack.c.h.b16 %v410
      %v611 = vunpack.c.l.b16 %v411
      %v612 = vunpack.c.h.b16 %v411
      %v613 = vunpack.c.l.b16 %v412
      %v614 = vunpack.c.h.b16 %v412
      %v615 = vunpack.c.l.b16 %v413
      %v616 = vunpack.c.h.b16 %v413
      %v617 = vunpack.c.l.b16 %v414
      %v618 = vpack.c.b16 %v591, %v582
      %v619 = vpack.c.b16 %v592, %v583
      %v620 = vpack.c.b16 %v593, %v584
      %v621 = vpack.c.b16 %v594, %v585
      %v622 = vpack.c.b16 %v595, %v586
      %v623 = vpack.c.b16 %v596, %v587
      %v624 = vpack.c.b16 %v597, %v588
      %v625 = vpack.c.b16 %v598, %v589
      %v626 = vpack.c.b16 %v599, %v590
      %v627 = vpack.c.b16 %v609, %v600
      %v628 = vpack.c.b16 %v610, %v601
      %v629 = vpack.c.b16 %v611, %v602
      %v630 = vpack.c.b16 %v612, %v603
      %v631 = vpack.c.b16 %v613, %v604
      %v632 = vpack.c.b16 %v614, %v605
      %v633 = vpack.c.b16 %v615, %v606
      %v634 = vpack.c.b16 %v616, %v607
      %v635 = vpack.c.b16 %v617, %v608
      %v792 = vunpack.c.l.b16 %v415
      %v793 = vunpack.c.l.b16 %v416
      %v794 = vunpack.c.l.b16 %v417
      %v795 = vunpack.c.l.b16 %v418
      %v796 = vunpack.c.l.b16 %v419
      %v797 = vunpack.c.l.b16 %v420
      %v798 = vunpack.c.l.b16 %v421
      %v799 = vunpack.c.l.b16 %v422
      %v800 = vunpack.c.l.b16 %v423
      %v801 = vunpack.c.l.b16 %v424
      %v802 = vunpack.c.l.b16 %v425
      %v803 = vunpack.c.l.b16 %v426
      %v804 = vunpack.c.l.b16 %v427
      %v805 = vunpack.c.l.b16 %v428
      %v806 = vunpack.c.l.b16 %v429
      %v807 = vunpack.c.l.b16 %v430
      %v808 = vunpack.c.l.b16 %v431
      %v809 = vunpack.c.l.b16 %v432
      %v810 = vunpack.c.l.b16 %v433
      %v811 = vunpack.c.l.b16 %v434
      %v812 = vunpack.c.l.b16 %v435
      %v813 = vunpack.c.l.b16 %v436
      %v814 = vunpack.c.l.b16 %v437
      %v815 = vunpack.c.l.b16 %v438
      %v816 = vunpack.c.l.b16 %v439
      %v817 = vunpack.c.l.b16 %v440
      %v818 = vunpack.c.l.b16 %v441
      %v819 = vunpack.c.l.b16 %v442
      %v820 = vunpack.c.l.b16 %v443
      %v821 = vunpack.c.l.b16 %v444
      %v822 = vunpack.c.l.b16 %v445
      %v823 = vunpack.c.l.b16 %v446
      %v824 = vunpack.c.l.b16 %v447
      %v825 = vunpack.c.l.b16 %v448
      %v826 = vunpack.c.l.b16 %v449
      %v827 = vunpack.c.l.b16 %v450
      %v828 = vunpack.c.l.b16 %v451
      %v829 = vunpack.c.l.b16 %v452
      %v830 = vunpack.c.l.b16 %v453
      %v831 = vunpack.c.l.b16 %v454
      %v832 = vunpack.c.l.b16 %v455
      %v833 = vunpack.c.l.b16 %v456
      %v834 = vunpack.c.l.b16 %v457
      %v835 = vunpack.c.l.b16 %v458
      %v836 = vunpack.c.l.b16 %v459
      %v837 = vunpack.c.l.b16 %v460
      %v838 = vunpack.c.l.b16 %v461
      %v839 = vunpack.c.l.b16 %v462
      %v840 = vunpack.c.l.b16 %v463
      %v841 = vunpack.c.l.b16 %v464
      %v842 = vunpack.c.l.b16 %v465
      %v843 = vunpack.c.l.b16 %v466
      %v844 = vunpack.c.l.b16 %v467
      %v845 = vunpack.c.l.b16 %v468
      %v846 = vunpack.c.l.b16 %v469
      %v847 = vunpack.c.l.b16 %v470
      %v848 = vunpack.c.l.b16 %v471
      %v849 = vunpack.c.l.b16 %v472
      %v850 = vunpack.c.l.b16 %v473
      %v851 = vunpack.c.l.b16 %v474
      %v852 = vunpack.c.l.b16 %v475
      %v853 = vunpack.c.l.b16 %v476
      %v854 = vunpack.c.l.b16 %v477
      %v855 = vunpack.c.l.b16 %v478
      %v856 = vunpack.c.l.b16 %v479
      %v857 = vunpack.c.l.b16 %v480
      %v858 = vunpack.c.l.b16 %v481
      %v859 = vunpack.c.l.b16 %v482
      %v860 = vunpack.c.l.b16 %v483
      %v861 = vunpack.c.l.b16 %v484
      %v862 = vunpack.c.l.b16 %v485
      %v863 = vunpack.c.l.b16 %v486
      %v864 = vunpack.c.l.b16 %v487
      %v865 = vunpack.c.l.b16 %v488
      %v866 = vunpack.c.l.b16 %v489
      %v867 = vunpack.c.l.b16 %v490
      %v868 = vunpack.c.l.b16 %v491
      %v869 = vunpack.c.l.b16 %v492
      %v870 = vunpack.c.l.b16 %v493
      %v871 = vunpack.c.l.b16 %v494
      %v872 = vunpack.c.l.b16 %v495
      %v873 = vunpack.c.l.b16 %v496
      %v874 = vunpack.c.l.b16 %v497
      %v875 = vunpack.c.l.b16 %v498
      %v876 = vunpack.c.l.b16 %v499
      %v877 = vunpack.c.l.b16 %v500
      %v878 = vunpack.c.l.b16 %v501
      %v879 = vunpack.c.l.b16 %v502
      %v880 = vunpack.c.l.b16 %v503
      %v881 = vunpack.c.l.b16 %v504
      %v882 = vunpack.c.l.b16 %v505
      %v883 = vunpack.c.l.b16 %v506
      %v884 = vunpack.c.l.b16 %v507
      %v885 = vunpack.c.l.b16 %v508
      %v886 = vunpack.c.l.b16 %v509
      %v887 = vunpack.c.l.b16 %v510
      %v888 = vunpack.c.l.b16 %v511
      %v889 = vunpack.c.l.b16 %v512
      %v890 = vunpack.c.l.b16 %v513
      %v891 = vunpack.c.l.b16 %v514
      %v892 = vunpack.c.l.b16 %v515
      %v893 = vunpack.c.l.b16 %v516
      %v894 = vunpack.c.l.b16 %v517
      %v895 = vunpack.c.l.b16 %v518
      %v896 = vunpack.c.l.b16 %v519
      %v897 = vunpack.c.l.b16 %v520
      %v898 = vunpack.c.l.b16 %v521
      %v899 = vunpack.c.l.b16 %v522
      %v900 = vunpack.c.l.b16 %v523
      %v901 = vunpack.c.l.b16 %v524
      %v902 = vunpack.c.l.b16 %v525
      %v903 = vunpack.c.l.b16 %v526
      %v904 = vunpack.c.l.b16 %v527
      %v905 = vunpack.c.l.b16 %v528
      %v906 = vunpack.c.l.b16 %v529
      %v907 = vunpack.c.l.b16 %v530
      %v908 = vunpack.c.l.b16 %v531
      %v909 = vunpack.c.l.b16 %v532
      %v910 = vunpack.c.l.b16 %v533
      %v911 = vunpack.c.l.b16 %v534
      %v912 = vunpack.c.l.b16 %v535
      %v913 = vunpack.c.l.b16 %v536
      %v914 = vunpack.c.l.b16 %v537
      %v915 = vunpack.c.l.b16 %v538
      %v916 = vunpack.c.l.b16 %v539
      %v917 = vunpack.c.l.b16 %v540
      %v918 = vunpack.c.l.b16 %v541
      %v919 = vunpack.c.l.b16 %v542
      %v920 = vunpack.c.l.b16 %v543
      %v921 = vunpack.c.l.b16 %v544
      %v922 = vunpack.c.l.b16 %v545
      %v923 = vunpack.c.l.b16 %v546
      %v924 = vunpack.c.l.b16 %v547
      %v925 = vunpack.c.l.b16 %v548
      %v926 = vunpack.c.l.b16 %v549
      %v927 = vunpack.c.l.b16 %v550
      %v928 = vunpack.c.l.b16 %v551
      %v929 = vunpack.c.l.b16 %v552
      %v930 = vunpack.c.l.b16 %v553
      %v931 = vunpack.c.l.b16 %v554
      %v932 = vpack.c.b16 %v793, %v792
      %v933 = vpack.c.b16 %v795, %v794
      %v934 = vpack.c.b16 %v797, %v796
      %v935 = vpack.c.b16 %v799, %v798
      %v936 = vpack.c.b16 %v801, %v800
      %v937 = vpack.c.b16 %v803, %v802
      %v938 = vpack.c.b16 %v805, %v804
      %v939 = vpack.c.b16 %v807, %v806
      %v940 = vpack.c.b16 %v809, %v808
      %v941 = vpack.c.b16 %v811, %v810
      %v942 = vpack.c.b16 %v813, %v812
      %v943 = vpack.c.b16 %v815, %v814
      %v944 = vpack.c.b16 %v817, %v816
      %v945 = vpack.c.b16 %v819, %v818
      %v946 = vpack.c.b16 %v821, %v820
      %v947 = vpack.c.b16 %v823, %v822
      %v948 = vpack.c.b16 %v825, %v824
      %v949 = vpack.c.b16 %v827, %v826
      %v950 = vpack.c.b16 %v829, %v828
      %v951 = vpack.c.b16 %v831, %v830
      %v952 = vpack.c.b16 %v833, %v832
      %v953 = vpack.c.b16 %v835, %v834
      %v954 = vpack.c.b16 %v837, %v836
      %v955 = vpack.c.b16 %v839, %v838
      %v956 = vpack.c.b16 %v841, %v840
      %v957 = vpack.c.b16 %v843, %v842
      %v958 = vpack.c.b16 %v845, %v844
      %v959 = vpack.c.b16 %v847, %v846
      %v960 = vpack.c.b16 %v849, %v848
      %v961 = vpack.c.b16 %v851, %v850
      %v962 = vpack.c.b16 %v853, %v852
      %v963 = vpack.c.b16 %v855, %v854
      %v964 = vpack.c.b16 %v857, %v856
      %v965 = vpack.c.b16 %v859, %v858
      %v966 = vpack.c.b16 %v861, %v860
      %v967 = vpack.c.b16 %v863, %v862
      %v968 = vpack.c.b16 %v865, %v864
      %v969 = vpack.c.b16 %v867, %v866
      %v970 = vpack.c.b16 %v869, %v868
      %v971 = vpack.c.b16 %v871, %v870
      %v972 = vpack.c.b16 %v873, %v872
      %v973 = vpack.c.b16 %v875, %v874
      %v974 = vpack.c.b16 %v877, %v876
      %v975 = vpack.c.b16 %v879, %v878
      %v976 = vpack.c.b16 %v881, %v880
      %v977 = vpack.c.b16 %v883, %v882
      %v978 = vpack.c.b16 %v885, %v884
      %v979 = vpack.c.b16 %v887, %v886
      %v980 = vpack.c.b16 %v889, %v888
      %v981 = vpack.c.b16 %v891, %v890
      %v982 = vpack.c.b16 %v893, %v892
      %v983 = vpack.c.b16 %v895, %v894
      %v984 = vpack.c.b16 %v897, %v896
      %v985 = vpack.c.b16 %v899, %v898
      %v986 = vpack.c.b16 %v901, %v900
      %v987 = vpack.c.b16 %v903, %v902
      %v988 = vpack.c.b16 %v905, %v904
      %v989 = vpack.c.b16 %v907, %v906
      %v990 = vpack.c.b16 %v909, %v908
      %v991 = vpack.c.b16 %v911, %v910
      %v992 = vpack.c.b16 %v913, %v912
      %v993 = vpack.c.b16 %v915, %v914
      %v994 = vpack.c.b16 %v917, %v916
      %v995 = vpack.c.b16 %v919, %v918
      %v996 = vpack.c.b16 %v921, %v920
      %v997 = vpack.c.b16 %v923, %v922
      %v998 = vpack.c.b16 %v925, %v924
      %v999 = vpack.c.b16 %v927, %v926
      %v1000 = vpack.c.b16 %v929, %v928
      %v1001 = vpack.c.b16 %v931, %v930
      %vm1072 = vcmask 785408
      %v1074 = vsel %vm1072, %v626, 0
      %v1077 = vsel %vm1072, %v635, 0
      %1079 = vmatprep.subr.bf16.mxu0 0
      %1080 = vmatpush1.bf16.msra.mxu0 %v932
      %1081 = vmatprep.subr.bf16.mxu0 0
      %1082 = vmatpush1.bf16.msra.mxu0 %v933
      %1083 = vmatprep.subr.bf16.mxu0 0
      %1084 = vmatpush1.bf16.msra.mxu0 %v934
      %1085 = vmatprep.subr.bf16.mxu0 0
      %1086 = vmatpush1.bf16.msra.mxu0 %v935
      %1087 = vmatprep.subr.bf16.mxu0 0
      %1088 = vmatpush1.bf16.msra.mxu0 %v936
      %1089 = vmatprep.subr.bf16.mxu0 0
      %1090 = vmatpush1.bf16.msra.mxu0 %v937
      %1091 = vmatprep.subr.bf16.mxu0 0
      %1092 = vmatpush1.bf16.msra.mxu0 %v938
      %1093 = vmatprep.subr.bf16.mxu0 0
      %1094 = vmatpush1.bf16.msra.mxu0 %v939
      %1095 = vmatprep.subr.bf16.mxu0 0
      %1096 = vmatpush1.bf16.msra.mxu0 %v940
      %1097 = vmatprep.subr.bf16.mxu0 0
      %1098 = vmatpush1.bf16.msra.mxu0 %v941
      %1099 = vmatprep.subr.bf16.mxu0 0
      %1100 = vmatpush1.bf16.msra.mxu0 %v942
      %1101 = vmatprep.subr.bf16.mxu0 0
      %1102 = vmatpush1.bf16.msra.mxu0 %v943
      %1103 = vmatprep.subr.bf16.mxu0 0
      %1104 = vmatpush1.bf16.msra.mxu0 %v944
      %1105 = vmatprep.subr.bf16.mxu0 0
      %1106 = vmatpush1.bf16.msra.mxu0 %v945
      %1107 = vmatprep.subr.bf16.mxu0 0
      %1108 = vmatpush1.bf16.msra.mxu0 %v946
      %1109 = vmatprep.subr.bf16.mxu0 0
      %1110 = vmatpush1.bf16.msra.mxu0 %v947
      %1111 = vmatprep.mubr.bf16.mxu0 %v619
      %1112 = vmatmul.mubr.bf16.gmra.mrb[0].mxu0 %v618
      %v1113 = vpop.f32.mrb[0].mxu0
      %v1114 = vadd.f32 %v560, %v1113
      %v1115 = vpop.f32.mrb[0].mxu0
      %v1116 = vpop.f32.mrb[0].mxu0
      %v1117 = vadd.f32 %v560, %v1116
      %v1118 = vpop.f32.mrb[0].mxu0
      %1119 = vmatprep.mubr.bf16.mxu0 %v628
      %1120 = vmatmul.mubr.bf16.gmra.mrb[0].mxu0 %v627
      %v1121 = vpop.f32.mrb[0].mxu0
      %v1122 = vadd.f32 %v560, %v1121
      %v1123 = vpop.f32.mrb[0].mxu0
      %v1124 = vpop.f32.mrb[0].mxu0
      %v1125 = vadd.f32 %v560, %v1124
      %v1126 = vpop.f32.mrb[0].mxu0
      %1127 = vdwg.mxu0
      %1128 = vmatprep.subr.bf16.mxu0 0
      %1129 = vmatpush1.bf16.msra.mxu0 %v948
      %1130 = vmatprep.subr.bf16.mxu0 0
      %1131 = vmatpush1.bf16.msra.mxu0 %v949
      %1132 = vmatprep.subr.bf16.mxu0 0
      %1133 = vmatpush1.bf16.msra.mxu0 %v950
      %1134 = vmatprep.subr.bf16.mxu0 0
      %1135 = vmatpush1.bf16.msra.mxu0 %v951
      %1136 = vmatprep.subr.bf16.mxu0 0
      %1137 = vmatpush1.bf16.msra.mxu0 %v952
      %1138 = vmatprep.subr.bf16.mxu0 0
      %1139 = vmatpush1.bf16.msra.mxu0 %v953
      %1140 = vmatprep.subr.bf16.mxu0 0
      %1141 = vmatpush1.bf16.msra.mxu0 %v954
      %1142 = vmatprep.subr.bf16.mxu0 0
      %1143 = vmatpush1.bf16.msra.mxu0 %v955
      %1144 = vmatprep.subr.bf16.mxu0 0
      %1145 = vmatpush1.bf16.msra.mxu0 %v956
      %1146 = vmatprep.subr.bf16.mxu0 0
      %1147 = vmatpush1.bf16.msra.mxu0 %v957
      %1148 = vmatprep.subr.bf16.mxu0 0
      %1149 = vmatpush1.bf16.msra.mxu0 %v958
      %1150 = vmatprep.subr.bf16.mxu0 0
      %1151 = vmatpush1.bf16.msra.mxu0 %v959
      %1152 = vmatprep.subr.bf16.mxu0 0
      %1153 = vmatpush1.bf16.msra.mxu0 %v960
      %1154 = vmatprep.subr.bf16.mxu0 0
      %1155 = vmatpush1.bf16.msra.mxu0 %v961
      %1156 = vmatprep.subr.bf16.mxu0 0
      %1157 = vmatpush1.bf16.msra.mxu0 %v962
      %1158 = vmatprep.subr.bf16.mxu0 0
      %1159 = vmatpush1.bf16.msra.mxu0 %v963
      %1160 = vmatprep.mubr.bf16.mxu0 %v621
      %1161 = vmatmul.mubr.bf16.gmra.mrb[0].mxu0 %v620
      %v1162 = vpop.f32.mrb[0].mxu0
      %v1163 = vadd.f32 %v1114, %v1162
      %v1164 = vpop.f32.mrb[0].mxu0
      %v1165 = vpop.f32.mrb[0].mxu0
      %v1166 = vadd.f32 %v1117, %v1165
      %v1167 = vpop.f32.mrb[0].mxu0
      %1168 = vmatprep.mubr.bf16.mxu0 %v630
      %1169 = vmatmul.mubr.bf16.gmra.mrb[0].mxu0 %v629
      %v1170 = vpop.f32.mrb[0].mxu0
      %v1171 = vadd.f32 %v1122, %v1170
      %v1172 = vpop.f32.mrb[0].mxu0
      %v1173 = vpop.f32.mrb[0].mxu0
      %v1174 = vadd.f32 %v1125, %v1173
      %v1175 = vpop.f32.mrb[0].mxu0
      %1176 = vdwg.mxu0
      %1177 = vmatprep.subr.bf16.mxu0 0
      %1178 = vmatpush1.bf16.msra.mxu0 %v964
      %1179 = vmatprep.subr.bf16.mxu0 0
      %1180 = vmatpush1.bf16.msra.mxu0 %v965
      %1181 = vmatprep.subr.bf16.mxu0 0
      %1182 = vmatpush1.bf16.msra.mxu0 %v966
      %1183 = vmatprep.subr.bf16.mxu0 0
      %1184 = vmatpush1.bf16.msra.mxu0 %v967
      %1185 = vmatprep.subr.bf16.mxu0 0
      %1186 = vmatpush1.bf16.msra.mxu0 %v968
      %1187 = vmatprep.subr.bf16.mxu0 0
      %1188 = vmatpush1.bf16.msra.mxu0 %v969
      %1189 = vmatprep.subr.bf16.mxu0 0
      %1190 = vmatpush1.bf16.msra.mxu0 %v970
      %1191 = vmatprep.subr.bf16.mxu0 0
      %1192 = vmatpush1.bf16.msra.mxu0 %v971
      %1193 = vmatprep.subr.bf16.mxu0 0
      %1194 = vmatpush1.bf16.msra.mxu0 %v972
      %1195 = vmatprep.subr.bf16.mxu0 0
      %1196 = vmatpush1.bf16.msra.mxu0 %v973
      %1197 = vmatprep.subr.bf16.mxu0 0
      %1198 = vmatpush1.bf16.msra.mxu0 %v974
      %1199 = vmatprep.subr.bf16.mxu0 0
      %1200 = vmatpush1.bf16.msra.mxu0 %v975
      %1201 = vmatprep.subr.bf16.mxu0 0
      %1202 = vmatpush1.bf16.msra.mxu0 %v976
      %1203 = vmatprep.subr.bf16.mxu0 0
      %1204 = vmatpush1.bf16.msra.mxu0 %v977
      %1205 = vmatprep.subr.bf16.mxu0 0
      %1206 = vmatpush1.bf16.msra.mxu0 %v978
      %1207 = vmatprep.subr.bf16.mxu0 0
      %1208 = vmatpush1.bf16.msra.mxu0 %v979
      %1209 = vmatprep.mubr.bf16.mxu0 %v623
      %1210 = vmatmul.mubr.bf16.gmra.mrb[0].mxu0 %v622
      %v1211 = vpop.f32.mrb[0].mxu0
      %v1212 = vadd.f32 %v1163, %v1211
      %v1213 = vpop.f32.mrb[0].mxu0
      %v1214 = vpop.f32.mrb[0].mxu0
      %v1215 = vadd.f32 %v1166, %v1214
      %v1216 = vpop.f32.mrb[0].mxu0
      %1217 = vmatprep.mubr.bf16.mxu0 %v632
      %1218 = vmatmul.mubr.bf16.gmra.mrb[0].mxu0 %v631
      %v1219 = vpop.f32.mrb[0].mxu0
      %v1220 = vadd.f32 %v1171, %v1219
      %v1221 = vpop.f32.mrb[0].mxu0
      %v1222 = vpop.f32.mrb[0].mxu0
      %v1223 = vadd.f32 %v1174, %v1222
      %v1224 = vpop.f32.mrb[0].mxu0
      %1225 = vdwg.mxu0
      %1226 = vmatprep.subr.bf16.mxu0 0
      %1227 = vmatpush1.bf16.msra.mxu0 %v980
      %1228 = vmatprep.subr.bf16.mxu0 0
      %1229 = vmatpush1.bf16.msra.mxu0 %v981
      %1230 = vmatprep.subr.bf16.mxu0 0
      %1231 = vmatpush1.bf16.msra.mxu0 %v982
      %1232 = vmatprep.subr.bf16.mxu0 0
      %1233 = vmatpush1.bf16.msra.mxu0 %v983
      %1234 = vmatprep.subr.bf16.mxu0 0
      %1235 = vmatpush1.bf16.msra.mxu0 %v984
      %1236 = vmatprep.subr.bf16.mxu0 0
      %1237 = vmatpush1.bf16.msra.mxu0 %v985
      %1238 = vmatprep.subr.bf16.mxu0 0
      %1239 = vmatpush1.bf16.msra.mxu0 %v986
      %1240 = vmatprep.subr.bf16.mxu0 0
      %1241 = vmatpush1.bf16.msra.mxu0 %v987
      %1242 = vmatprep.subr.bf16.mxu0 0
      %1243 = vmatpush1.bf16.msra.mxu0 %v988
      %1244 = vmatprep.subr.bf16.mxu0 0
      %1245 = vmatpush1.bf16.msra.mxu0 %v989
      %1246 = vmatprep.subr.bf16.mxu0 0
      %1247 = vmatpush1.bf16.msra.mxu0 %v990
      %1248 = vmatprep.subr.bf16.mxu0 0
      %1249 = vmatpush1.bf16.msra.mxu0 %v991
      %1250 = vmatprep.subr.bf16.mxu0 0
      %1251 = vmatpush1.bf16.msra.mxu0 %v992
      %1252 = vmatprep.subr.bf16.mxu0 0
      %1253 = vmatpush1.bf16.msra.mxu0 %v993
      %1254 = vmatprep.subr.bf16.mxu0 0
      %1255 = vmatpush1.bf16.msra.mxu0 %v994
      %1256 = vmatprep.subr.bf16.mxu0 0
      %1257 = vmatpush1.bf16.msra.mxu0 %v995
      %1258 = vmatprep.mubr.bf16.mxu0 %v625
      %1259 = vmatmul.mubr.bf16.gmra.mrb[0].mxu0 %v624
      %v1260 = vpop.f32.mrb[0].mxu0
      %v1261 = vadd.f32 %v1212, %v1260
      %v1262 = vpop.f32.mrb[0].mxu0
      %v1263 = vpop.f32.mrb[0].mxu0
      %v1264 = vadd.f32 %v1215, %v1263
      %v1265 = vpop.f32.mrb[0].mxu0
      %1266 = vmatprep.mubr.bf16.mxu0 %v634
      %1267 = vmatmul.mubr.bf16.gmra.mrb[0].mxu0 %v633
      %v1268 = vpop.f32.mrb[0].mxu0
      %v1269 = vadd.f32 %v1220, %v1268
      %v1270 = vpop.f32.mrb[0].mxu0
      %v1271 = vpop.f32.mrb[0].mxu0
      %v1272 = vadd.f32 %v1223, %v1271
      %v1273 = vpop.f32.mrb[0].mxu0
      %1274 = vdwg.mxu0
      %1275 = vmatprep.subr.bf16.mxu0 0
      %1276 = vmatpush1.bf16.msra.mxu0 %v996
      %1277 = vmatprep.subr.bf16.mxu0 0
      %1278 = vmatpush1.bf16.msra.mxu0 %v997
      %1279 = vmatprep.subr.bf16.mxu0 0
      %1280 = vmatpush1.bf16.msra.mxu0 %v998
      %1281 = vmatprep.subr.bf16.mxu0 0
      %1282 = vmatpush1.bf16.msra.mxu0 %v999
      %1283 = vmatprep.subr.bf16.mxu0 0
      %1284 = vmatpush1.bf16.msra.mxu0 %v1000
      %1285 = vmatprep.subr.bf16.mxu0 0
      %1286 = vmatpush1.bf16.msra.mxu0 %v1001
      %1287 = vmatprep.subr.bf16.mxu0 0
      %1288 = vmatpush1.bf16.msra.mxu0 0
      %1289 = vmatprep.subr.bf16.mxu0 0
      %1290 = vmatpush1.bf16.msra.mxu0 0
      %1291 = vmatprep.subr.bf16.mxu0 0
      %1292 = vmatpush1.bf16.msra.mxu0 0
      %1293 = vmatprep.subr.bf16.mxu0 0
      %1294 = vmatpush1.bf16.msra.mxu0 0
      %1295 = vmatprep.subr.bf16.mxu0 0
      %1296 = vmatpush1.bf16.msra.mxu0 0
      %1297 = vmatprep.subr.bf16.mxu0 0
      %1298 = vmatpush1.bf16.msra.mxu0 0
      %1299 = vmatprep.subr.bf16.mxu0 0
      %1300 = vmatpush1.bf16.msra.mxu0 0
      %1301 = vmatprep.subr.bf16.mxu0 0
      %1302 = vmatpush1.bf16.msra.mxu0 0
      %1303 = vmatprep.subr.bf16.mxu0 0
      %1304 = vmatpush1.bf16.msra.mxu0 0
      %1305 = vmatprep.subr.bf16.mxu0 0
      %1306 = vmatpush1.bf16.msra.mxu0 0
      %1307 = vmatprep.mubr.bf16.mxu0 0
      %1308 = vmatmul.mubr.bf16.gmra.mrb[0].mxu0 %v1074
      %v1309 = vpop.f32.mrb[0].mxu0
      %v1310 = vadd.f32 %v1261, %v1309
      %v1311 = vpop.f32.mrb[0].mxu0
      %v1312 = vpop.f32.mrb[0].mxu0
      %v1313 = vadd.f32 %v1264, %v1312
      %v1314 = vpop.f32.mrb[0].mxu0
      %1315 = vmatprep.mubr.bf16.mxu0 0
      %1316 = vmatmul.mubr.bf16.gmra.mrb[0].mxu0 %v1077
      %v1317 = vpop.f32.mrb[0].mxu0
      %v1318 = vadd.f32 %v1269, %v1317
      %v1319 = vpop.f32.mrb[0].mxu0
      %v1320 = vpop.f32.mrb[0].mxu0
      %v1321 = vadd.f32 %v1272, %v1320
      %v1322 = vpop.f32.mrb[0].mxu0
      %1323 = vdwg.mxu0
      %1324 = vst [vmem:[#allocation2] sm:$0xff] %v1310
      %1325 = vst [vmem:[#allocation2 + $0x8] sm:$0xff] %v1313
      %1326 = vst [vmem:[#allocation2 + $0x10] sm:$0xff] %v1318
      %1327 = vst [vmem:[#allocation2 + $0x18] sm:$0xff] %v1321
      %v1328 = vld [vmem:[%s4] sm:$0xff]
      %v1329 = vld [vmem:[%s4 + $0x8] sm:$0xff]
      %v1330 = vld [vmem:[%s4 + $0x10] sm:$0xff]
      %v1331 = vld [vmem:[%s4 + $0x18] sm:$0xff]
      %v1332 = vld [vmem:[%s384] sm:$0xff]
      %v1333 = vld [vmem:[%s388] sm:$0xff]
      %v1334 = vld [vmem:[#allocation2] sm:$0xff]
      %vm1335 = vcmask 261120
      %v1337 = vsel %vm1335, %v1332, 0
      %1339 = vmatprep.subr.mxu0 0.0
      %1340 = vmatpush1.msra.mxu0 %v1328
      %1341 = vmatprep.subr.mxu0 0.0
      %1342 = vmatpush1.msra.mxu0 %v1329
      %1343 = vmatprep.subr.mxu0 0.0
      %1344 = vmatpush1.msra.mxu0 %v1330
      %1345 = vmatprep.subr.mxu0 0.0
      %1346 = vmatpush1.msra.mxu0 %v1331
      %1347 = vmatprep.subr.mxu0 0.0
      %1348 = vmatpush1.msra.mxu0 0.0
      %1349 = vmatprep.subr.mxu0 0.0
      %1350 = vmatpush1.msra.mxu0 0.0
      %1351 = vmatprep.subr.mxu0 0.0
      %1352 = vmatpush1.msra.mxu0 0.0
      %1353 = vmatprep.subr.mxu0 0.0
      %1354 = vmatpush1.msra.mxu0 0.0
      %1355 = vmatprep.subr.mxu0 0.0
      %1356 = vmatpush1.msra.mxu0 0.0
      %1357 = vmatprep.subr.mxu0 0.0
      %1358 = vmatpush1.msra.mxu0 0.0
      %1359 = vmatprep.subr.mxu0 0.0
      %1360 = vmatpush1.msra.mxu0 0.0
      %1361 = vmatprep.subr.mxu0 0.0
      %1362 = vmatpush1.msra.mxu0 0.0
      %1363 = vmatprep.subr.mxu0 0.0
      %1364 = vmatpush1.msra.mxu0 0.0
      %1365 = vmatprep.subr.mxu0 0.0
      %1366 = vmatpush1.msra.mxu0 0.0
      %1367 = vmatprep.subr.mxu0 0.0
      %1368 = vmatpush1.msra.mxu0 0.0
      %1369 = vmatprep.subr.mxu0 0.0
      %1370 = vmatpush1.msra.mxu0 0.0
      %1371 = vmatprep.subr.mxu0 0.0
      %1372 = vmatpush1.msra.mxu0 0.0
      %1373 = vmatprep.subr.mxu0 0.0
      %1374 = vmatpush1.msra.mxu0 0.0
      %1375 = vmatprep.subr.mxu0 0.0
      %1376 = vmatpush1.msra.mxu0 0.0
      %1377 = vmatprep.subr.mxu0 0.0
      %1378 = vmatpush1.msra.mxu0 0.0
      %1379 = vmatprep.subr.mxu0 0.0
      %1380 = vmatpush1.msra.mxu0 0.0
      %1381 = vmatprep.subr.mxu0 0.0
      %1382 = vmatpush1.msra.mxu0 0.0
      %1383 = vmatprep.subr.mxu0 0.0
      %1384 = vmatpush1.msra.mxu0 0.0
      %1385 = vmatprep.subr.mxu0 0.0
      %1386 = vmatpush1.msra.mxu0 0.0
      %1387 = vmatprep.subr.mxu0 0.0
      %1388 = vmatpush1.msra.mxu0 0.0
      %1389 = vmatprep.subr.mxu0 0.0
      %1390 = vmatpush1.msra.mxu0 0.0
      %1391 = vmatprep.subr.mxu0 0.0
      %1392 = vmatpush1.msra.mxu0 0.0
      %1393 = vmatprep.subr.mxu0 0.0
      %1394 = vmatpush1.msra.mxu0 0.0
      %1395 = vmatprep.subr.mxu0 0.0
      %1396 = vmatpush1.msra.mxu0 0.0
      %1397 = vmatprep.subr.mxu0 0.0
      %1398 = vmatpush1.msra.mxu0 0.0
      %1399 = vmatprep.subr.mxu0 0.0
      %1400 = vmatpush1.msra.mxu0 0.0
      %1401 = vmatprep.subr.mxu0 0.0
      %1402 = vmatpush1.msra.mxu0 0.0
      %1403 = vmatprep.mubr.f32.mxu0 0.0
      %1404 = vmatmul.mubr.f32.gmra.mrb[0].mxu0 %v1337
      %v1405 = vpop.f32.mrb[0].mxu0
      %v1406 = vadd.f32 0.0, %v1405
      %v1407 = vpop.f32.mrb[0].mxu0
      %1408 = vdwg.mxu0
      %v1409 = vadd.f32 %v1334, %v1406
      %v1410 = vxor.u32 %v1409, 2147483648
      %v1411 = vmul.f32 %v1410, 1.442695
      %v1412 = vpow.pop %v1411
      %v1413 = vadd.f32 %v1412, 1.0
      %v1414 = vrcp.pop %v1413
      %v1415 = vmul.f32 1.0, %v1414
      %v1416 = vmul.f32 %v1415, 2.0
      %v1417 = vsub.f32 %v1416, 1.0
      %1419 = vrot.lane.b32.xlu0 %v1333, 32
      %v1420 = vpop.permute.xlu0 %1419
      %v1422 = vmul.f32 %v1415, %v1420
      %1424 = vrot.lane.b32.xlu0 %v1417, 32
      %v1425 = vpop.permute.xlu0 %1424
      %v1427 = vmul.f32 %v1415, %v1425
      %1429 = vrot.lane.b32.xlu0 %v1427, 32
      %v1430 = vpop.permute.xlu0 %1429
      %v1432 = vadd.f32 %v1422, %v1430
      %v1433 = vtanh.pop %v1432
      %1435 = vrot.lane.b32.xlu0 %v1433, 32
      %v1436 = vpop.permute.xlu0 %1435
      %v1438 = vmul.f32 %v1415, %v1436
      %1440 = vrot.lane.b32.xlu0 %v1438, 64
      %v1441 = vpop.permute.xlu0 %1440
      %1443 = vst.msk [vmem:[#allocation3] sm:$0xff] %vm1335, %v1441
      %s1444 = scalar_lea.vmem [#allocation2], 8
      %v1445 = vld [vmem:[%s1444] sm:$0xff]
      %v1446 = vsel %vm1335, %v1441, 0
      %1448 = vmatprep.subr.mxu0 0.0
      %1449 = vmatpush1.msra.mxu0 %v1328
      %1450 = vmatprep.subr.mxu0 0.0
      %1451 = vmatpush1.msra.mxu0 %v1329
      %1452 = vmatprep.subr.mxu0 0.0
      %1453 = vmatpush1.msra.mxu0 %v1330
      %1454 = vmatprep.subr.mxu0 0.0
      %1455 = vmatpush1.msra.mxu0 %v1331
      %1456 = vmatprep.subr.mxu0 0.0
      %1457 = vmatpush1.msra.mxu0 0.0
      %1458 = vmatprep.subr.mxu0 0.0
      %1459 = vmatpush1.msra.mxu0 0.0
      %1460 = vmatprep.subr.mxu0 0.0
      %1461 = vmatpush1.msra.mxu0 0.0
      %1462 = vmatprep.subr.mxu0 0.0
      %1463 = vmatpush1.msra.mxu0 0.0
      %1464 = vmatprep.subr.mxu0 0.0
      %1465 = vmatpush1.msra.mxu0 0.0
      %1466 = vmatprep.subr.mxu0 0.0
      %1467 = vmatpush1.msra.mxu0 0.0
      %1468 = vmatprep.subr.mxu0 0.0
      %1469 = vmatpush1.msra.mxu0 0.0
      %1470 = vmatprep.subr.mxu0 0.0
      %1471 = vmatpush1.msra.mxu0 0.0
      %1472 = vmatprep.subr.mxu0 0.0
      %1473 = vmatpush1.msra.mxu0 0.0
      %1474 = vmatprep.subr.mxu0 0.0
      %1475 = vmatpush1.msra.mxu0 0.0
      %1476 = vmatprep.subr.mxu0 0.0
      %1477 = vmatpush1.msra.mxu0 0.0
      %1478 = vmatprep.subr.mxu0 0.0
      %1479 = vmatpush1.msra.mxu0 0.0
      %1480 = vmatprep.subr.mxu0 0.0
      %1481 = vmatpush1.msra.mxu0 0.0
      %1482 = vmatprep.subr.mxu0 0.0
      %1483 = vmatpush1.msra.mxu0 0.0
      %1484 = vmatprep.subr.mxu0 0.0
      %1485 = vmatpush1.msra.mxu0 0.0
      %1486 = vmatprep.subr.mxu0 0.0
      %1487 = vmatpush1.msra.mxu0 0.0
      %1488 = vmatprep.subr.mxu0 0.0
      %1489 = vmatpush1.msra.mxu0 0.0
      %1490 = vmatprep.subr.mxu0 0.0
      %1491 = vmatpush1.msra.mxu0 0.0
      %1492 = vmatprep.subr.mxu0 0.0
      %1493 = vmatpush1.msra.mxu0 0.0
      %1494 = vmatprep.subr.mxu0 0.0
      %1495 = vmatpush1.msra.mxu0 0.0
      %1496 = vmatprep.subr.mxu0 0.0
      %1497 = vmatpush1.msra.mxu0 0.0
      %1498 = vmatprep.subr.mxu0 0.0
      %1499 = vmatpush1.msra.mxu0 0.0
      %1500 = vmatprep.subr.mxu0 0.0
      %1501 = vmatpush1.msra.mxu0 0.0
      %1502 = vmatprep.subr.mxu0 0.0
      %1503 = vmatpush1.msra.mxu0 0.0
      %1504 = vmatprep.subr.mxu0 0.0
      %1505 = vmatpush1.msra.mxu0 0.0
      %1506 = vmatprep.subr.mxu0 0.0
      %1507 = vmatpush1.msra.mxu0 0.0
      %1508 = vmatprep.subr.mxu0 0.0
      %1509 = vmatpush1.msra.mxu0 0.0
      %1510 = vmatprep.subr.mxu0 0.0
      %1511 = vmatpush1.msra.mxu0 0.0
      %1512 = vmatprep.mubr.f32.mxu0 0.0
      %1513 = vmatmul.mubr.f32.gmra.mrb[0].mxu0 %v1446
      %v1514 = vpop.f32.mrb[0].mxu0
      %v1515 = vadd.f32 0.0, %v1514
      %v1516 = vpop.f32.mrb[0].mxu0
      %1517 = vdwg.mxu0
      %v1518 = vadd.f32 %v1445, %v1515
      %v1519 = vxor.u32 %v1518, 2147483648
      %v1520 = vmul.f32 %v1519, 1.442695
      %v1521 = vpow.pop %v1520
      %v1522 = vadd.f32 %v1521, 1.0
      %v1523 = vrcp.pop %v1522
      %v1524 = vmul.f32 1.0, %v1523
      %v1525 = vmul.f32 %v1524, 2.0
      %v1526 = vsub.f32 %v1525, 1.0
      %v1527 = vmul.f32 %v1524, %v1432
      %1529 = vrot.lane.b32.xlu0 %v1526, 32
      %v1530 = vpop.permute.xlu0 %1529
      %v1532 = vmul.f32 %v1524, %v1530
      %1534 = vrot.lane.b32.xlu0 %v1532, 32
      %v1535 = vpop.permute.xlu0 %1534
      %v1537 = vadd.f32 %v1527, %v1535
      %v1538 = vtanh.pop %v1537
      %1540 = vrot.lane.b32.xlu0 %v1538, 32
      %v1541 = vpop.permute.xlu0 %1540
      %v1543 = vmul.f32 %v1524, %v1541
      %1545 = vrot.lane.b32.xlu0 %v1543, 64
      %v1546 = vpop.permute.xlu0 %1545
      %s1548 = scalar_lea.vmem [#allocation3], 8
      %1549 = vst.msk [vmem:[%s1548] sm:$0xff] %vm1335, %v1546
      %s1550 = scalar_lea.vmem [#allocation2], 16
      %v1551 = vld [vmem:[%s1550] sm:$0xff]
      %v1552 = vsel %vm1335, %v1546, 0
      %1554 = vmatprep.subr.mxu0 0.0
      %1555 = vmatpush1.msra.mxu0 %v1328
      %1556 = vmatprep.subr.mxu0 0.0
      %1557 = vmatpush1.msra.mxu0 %v1329
      %1558 = vmatprep.subr.mxu0 0.0
      %1559 = vmatpush1.msra.mxu0 %v1330
      %1560 = vmatprep.subr.mxu0 0.0
      %1561 = vmatpush1.msra.mxu0 %v1331
      %1562 = vmatprep.subr.mxu0 0.0
      %1563 = vmatpush1.msra.mxu0 0.0
      %1564 = vmatprep.subr.mxu0 0.0
      %1565 = vmatpush1.msra.mxu0 0.0
      %1566 = vmatprep.subr.mxu0 0.0
      %1567 = vmatpush1.msra.mxu0 0.0
      %1568 = vmatprep.subr.mxu0 0.0
      %1569 = vmatpush1.msra.mxu0 0.0
      %1570 = vmatprep.subr.mxu0 0.0
      %1571 = vmatpush1.msra.mxu0 0.0
      %1572 = vmatprep.subr.mxu0 0.0
      %1573 = vmatpush1.msra.mxu0 0.0
      %1574 = vmatprep.subr.mxu0 0.0
      %1575 = vmatpush1.msra.mxu0 0.0
      %1576 = vmatprep.subr.mxu0 0.0
      %1577 = vmatpush1.msra.mxu0 0.0
      %1578 = vmatprep.subr.mxu0 0.0
      %1579 = vmatpush1.msra.mxu0 0.0
      %1580 = vmatprep.subr.mxu0 0.0
      %1581 = vmatpush1.msra.mxu0 0.0
      %1582 = vmatprep.subr.mxu0 0.0
      %1583 = vmatpush1.msra.mxu0 0.0
      %1584 = vmatprep.subr.mxu0 0.0
      %1585 = vmatpush1.msra.mxu0 0.0
      %1586 = vmatprep.subr.mxu0 0.0
      %1587 = vmatpush1.msra.mxu0 0.0
      %1588 = vmatprep.subr.mxu0 0.0
      %1589 = vmatpush1.msra.mxu0 0.0
      %1590 = vmatprep.subr.mxu0 0.0
      %1591 = vmatpush1.msra.mxu0 0.0
      %1592 = vmatprep.subr.mxu0 0.0
      %1593 = vmatpush1.msra.mxu0 0.0
      %1594 = vmatprep.subr.mxu0 0.0
      %1595 = vmatpush1.msra.mxu0 0.0
      %1596 = vmatprep.subr.mxu0 0.0
      %1597 = vmatpush1.msra.mxu0 0.0
      %1598 = vmatprep.subr.mxu0 0.0
      %1599 = vmatpush1.msra.mxu0 0.0
      %1600 = vmatprep.subr.mxu0 0.0
      %1601 = vmatpush1.msra.mxu0 0.0
      %1602 = vmatprep.subr.mxu0 0.0
      %1603 = vmatpush1.msra.mxu0 0.0
      %1604 = vmatprep.subr.mxu0 0.0
      %1605 = vmatpush1.msra.mxu0 0.0
      %1606 = vmatprep.subr.mxu0 0.0
      %1607 = vmatpush1.msra.mxu0 0.0
      %1608 = vmatprep.subr.mxu0 0.0
      %1609 = vmatpush1.msra.mxu0 0.0
      %1610 = vmatprep.subr.mxu0 0.0
      %1611 = vmatpush1.msra.mxu0 0.0
      %1612 = vmatprep.subr.mxu0 0.0
      %1613 = vmatpush1.msra.mxu0 0.0
      %1614 = vmatprep.subr.mxu0 0.0
      %1615 = vmatpush1.msra.mxu0 0.0
      %1616 = vmatprep.subr.mxu0 0.0
      %1617 = vmatpush1.msra.mxu0 0.0
      %1618 = vmatprep.mubr.f32.mxu0 0.0
      %1619 = vmatmul.mubr.f32.gmra.mrb[0].mxu0 %v1552
      %v1620 = vpop.f32.mrb[0].mxu0
      %v1621 = vadd.f32 0.0, %v1620
      %v1622 = vpop.f32.mrb[0].mxu0
      %1623 = vdwg.mxu0
      %v1624 = vadd.f32 %v1551, %v1621
      %v1625 = vxor.u32 %v1624, 2147483648
      %v1626 = vmul.f32 %v1625, 1.442695
      %v1627 = vpow.pop %v1626
      %v1628 = vadd.f32 %v1627, 1.0
      %v1629 = vrcp.pop %v1628
      %v1630 = vmul.f32 1.0, %v1629
      %v1631 = vmul.f32 %v1630, 2.0
      %v1632 = vsub.f32 %v1631, 1.0
      %v1633 = vmul.f32 %v1630, %v1537
      %1635 = vrot.lane.b32.xlu0 %v1632, 32
      %v1636 = vpop.permute.xlu0 %1635
      %v1638 = vmul.f32 %v1630, %v1636
      %1640 = vrot.lane.b32.xlu0 %v1638, 32
      %v1641 = vpop.permute.xlu0 %1640
      %v1643 = vadd.f32 %v1633, %v1641
      %v1644 = vtanh.pop %v1643
      %1646 = vrot.lane.b32.xlu0 %v1644, 32
      %v1647 = vpop.permute.xlu0 %1646
      %v1649 = vmul.f32 %v1630, %v1647
      %1651 = vrot.lane.b32.xlu0 %v1649, 64
      %v1652 = vpop.permute.xlu0 %1651
      %s1654 = scalar_lea.vmem [#allocation3], 16
      %1655 = vst.msk [vmem:[%s1654] sm:$0xff] %vm1335, %v1652
      %s1656 = scalar_lea.vmem [#allocation2], 24
      %v1657 = vld [vmem:[%s1656] sm:$0xff]
      %v1658 = vsel %vm1335, %v1652, 0
      %1660 = vmatprep.subr.mxu0 0.0
      %1661 = vmatpush1.msra.mxu0 %v1328
      %1662 = vmatprep.subr.mxu0 0.0
      %1663 = vmatpush1.msra.mxu0 %v1329
      %1664 = vmatprep.subr.mxu0 0.0
      %1665 = vmatpush1.msra.mxu0 %v1330
      %1666 = vmatprep.subr.mxu0 0.0
      %1667 = vmatpush1.msra.mxu0 %v1331
      %1668 = vmatprep.subr.mxu0 0.0
      %1669 = vmatpush1.msra.mxu0 0.0
      %1670 = vmatprep.subr.mxu0 0.0
      %1671 = vmatpush1.msra.mxu0 0.0
      %1672 = vmatprep.subr.mxu0 0.0
      %1673 = vmatpush1.msra.mxu0 0.0
      %1674 = vmatprep.subr.mxu0 0.0
      %1675 = vmatpush1.msra.mxu0 0.0
      %1676 = vmatprep.subr.mxu0 0.0
      %1677 = vmatpush1.msra.mxu0 0.0
      %1678 = vmatprep.subr.mxu0 0.0
      %1679 = vmatpush1.msra.mxu0 0.0
      %1680 = vmatprep.subr.mxu0 0.0
      %1681 = vmatpush1.msra.mxu0 0.0
      %1682 = vmatprep.subr.mxu0 0.0
      %1683 = vmatpush1.msra.mxu0 0.0
      %1684 = vmatprep.subr.mxu0 0.0
      %1685 = vmatpush1.msra.mxu0 0.0
      %1686 = vmatprep.subr.mxu0 0.0
      %1687 = vmatpush1.msra.mxu0 0.0
      %1688 = vmatprep.subr.mxu0 0.0
      %1689 = vmatpush1.msra.mxu0 0.0
      %1690 = vmatprep.subr.mxu0 0.0
      %1691 = vmatpush1.msra.mxu0 0.0
      %1692 = vmatprep.subr.mxu0 0.0
      %1693 = vmatpush1.msra.mxu0 0.0
      %1694 = vmatprep.subr.mxu0 0.0
      %1695 = vmatpush1.msra.mxu0 0.0
      %1696 = vmatprep.subr.mxu0 0.0
      %1697 = vmatpush1.msra.mxu0 0.0
      %1698 = vmatprep.subr.mxu0 0.0
      %1699 = vmatpush1.msra.mxu0 0.0
      %1700 = vmatprep.subr.mxu0 0.0
      %1701 = vmatpush1.msra.mxu0 0.0
      %1702 = vmatprep.subr.mxu0 0.0
      %1703 = vmatpush1.msra.mxu0 0.0
      %1704 = vmatprep.subr.mxu0 0.0
      %1705 = vmatpush1.msra.mxu0 0.0
      %1706 = vmatprep.subr.mxu0 0.0
      %1707 = vmatpush1.msra.mxu0 0.0
      %1708 = vmatprep.subr.mxu0 0.0
      %1709 = vmatpush1.msra.mxu0 0.0
      %1710 = vmatprep.subr.mxu0 0.0
      %1711 = vmatpush1.msra.mxu0 0.0
      %1712 = vmatprep.subr.mxu0 0.0
      %1713 = vmatpush1.msra.mxu0 0.0
      %1714 = vmatprep.subr.mxu0 0.0
      %1715 = vmatpush1.msra.mxu0 0.0
      %1716 = vmatprep.subr.mxu0 0.0
      %1717 = vmatpush1.msra.mxu0 0.0
      %1718 = vmatprep.subr.mxu0 0.0
      %1719 = vmatpush1.msra.mxu0 0.0
      %1720 = vmatprep.subr.mxu0 0.0
      %1721 = vmatpush1.msra.mxu0 0.0
      %1722 = vmatprep.subr.mxu0 0.0
      %1723 = vmatpush1.msra.mxu0 0.0
      %1724 = vmatprep.mubr.f32.mxu0 0.0
      %1725 = vmatmul.mubr.f32.gmra.mrb[0].mxu0 %v1658
      %v1726 = vpop.f32.mrb[0].mxu0
      %v1727 = vadd.f32 0.0, %v1726
      %v1728 = vpop.f32.mrb[0].mxu0
      %1729 = vdwg.mxu0
      %v1730 = vadd.f32 %v1657, %v1727
      %v1731 = vxor.u32 %v1730, 2147483648
      %v1732 = vmul.f32 %v1731, 1.442695
      %v1733 = vpow.pop %v1732
      %v1734 = vadd.f32 %v1733, 1.0
      %v1735 = vrcp.pop %v1734
      %v1736 = vmul.f32 1.0, %v1735
      %v1737 = vmul.f32 %v1736, 2.0
      %v1738 = vsub.f32 %v1737, 1.0
      %v1739 = vmul.f32 %v1736, %v1643
      %1741 = vrot.lane.b32.xlu0 %v1738, 32
      %v1742 = vpop.permute.xlu0 %1741
      %v1744 = vmul.f32 %v1736, %v1742
      %1746 = vrot.lane.b32.xlu0 %v1744, 32
      %v1747 = vpop.permute.xlu0 %1746
      %v1749 = vadd.f32 %v1739, %v1747
      %v1750 = vtanh.pop %v1749
      %1752 = vrot.lane.b32.xlu0 %v1750, 32
      %v1753 = vpop.permute.xlu0 %1752
      %v1755 = vmul.f32 %v1736, %v1753
      %1757 = vrot.lane.b32.xlu0 %v1755, 64
      %v1758 = vpop.permute.xlu0 %1757
      %s1760 = scalar_lea.vmem [#allocation3], 24
      %1761 = vst.msk [vmem:[%s1760] sm:$0xff] %vm1335, %v1758
      %v1762 = vld [vmem:[#allocation3] sm:$0xff]
      %v1763 = vld [vmem:[#allocation3 + $0x8] sm:$0xff]
      %v1764 = vld [vmem:[#allocation3 + $0x10] sm:$0xff]
      %v1765 = vld [vmem:[#allocation3 + $0x18] sm:$0xff]
      %v1766 = vld [vmem:[%s6] sm:$0xff]
      %v1767 = vld [vmem:[%s6 + $0x8] sm:$0xff]
      %v1768 = vld [vmem:[%s6 + $0x10] sm:$0xff]
      %v1769 = vld [vmem:[%s6 + $0x18] sm:$0xff]
      %v1770 = vld [vmem:[%s7] sm:$0x1]
      %v1772 = vlaneseq
      %v1773 = vshrl.u32 %v1772, 7
      %v1774 = vsub.s32 0, %v1773
      %v1775 = vrot.slane %v1770, %v1774
      %v1778 = vsel %vm1335, %v1762, 0
      %v1781 = vsel %vm1335, %v1763, 0
      %v1784 = vsel %vm1335, %v1764, 0
      %v1787 = vsel %vm1335, %v1765, 0
      %1789 = vmatprep.subr.mxu0 0.0
      %1790 = vmatpush1.msra.mxu0 %v1766
      %1791 = vmatprep.subr.mxu0 0.0
      %1792 = vmatpush1.msra.mxu0 %v1767
      %1793 = vmatprep.subr.mxu0 0.0
      %1794 = vmatpush1.msra.mxu0 %v1768
      %1795 = vmatprep.subr.mxu0 0.0
      %1796 = vmatpush1.msra.mxu0 %v1769
      %1797 = vmatprep.subr.mxu0 0.0
      %1798 = vmatpush1.msra.mxu0 0.0
      %1799 = vmatprep.subr.mxu0 0.0
      %1800 = vmatpush1.msra.mxu0 0.0
      %1801 = vmatprep.subr.mxu0 0.0
      %1802 = vmatpush1.msra.mxu0 0.0
      %1803 = vmatprep.subr.mxu0 0.0
      %1804 = vmatpush1.msra.mxu0 0.0
      %1805 = vmatprep.subr.mxu0 0.0
      %1806 = vmatpush1.msra.mxu0 0.0
      %1807 = vmatprep.subr.mxu0 0.0
      %1808 = vmatpush1.msra.mxu0 0.0
      %1809 = vmatprep.subr.mxu0 0.0
      %1810 = vmatpush1.msra.mxu0 0.0
      %1811 = vmatprep.subr.mxu0 0.0
      %1812 = vmatpush1.msra.mxu0 0.0
      %1813 = vmatprep.subr.mxu0 0.0
      %1814 = vmatpush1.msra.mxu0 0.0
      %1815 = vmatprep.subr.mxu0 0.0
      %1816 = vmatpush1.msra.mxu0 0.0
      %1817 = vmatprep.subr.mxu0 0.0
      %1818 = vmatpush1.msra.mxu0 0.0
      %1819 = vmatprep.subr.mxu0 0.0
      %1820 = vmatpush1.msra.mxu0 0.0
      %1821 = vmatprep.subr.mxu0 0.0
      %1822 = vmatpush1.msra.mxu0 0.0
      %1823 = vmatprep.subr.mxu0 0.0
      %1824 = vmatpush1.msra.mxu0 0.0
      %1825 = vmatprep.subr.mxu0 0.0
      %1826 = vmatpush1.msra.mxu0 0.0
      %1827 = vmatprep.subr.mxu0 0.0
      %1828 = vmatpush1.msra.mxu0 0.0
      %1829 = vmatprep.subr.mxu0 0.0
      %1830 = vmatpush1.msra.mxu0 0.0
      %1831 = vmatprep.subr.mxu0 0.0
      %1832 = vmatpush1.msra.mxu0 0.0
      %1833 = vmatprep.subr.mxu0 0.0
      %1834 = vmatpush1.msra.mxu0 0.0
      %1835 = vmatprep.subr.mxu0 0.0
      %1836 = vmatpush1.msra.mxu0 0.0
      %1837 = vmatprep.subr.mxu0 0.0
      %1838 = vmatpush1.msra.mxu0 0.0
      %1839 = vmatprep.subr.mxu0 0.0
      %1840 = vmatpush1.msra.mxu0 0.0
      %1841 = vmatprep.subr.mxu0 0.0
      %1842 = vmatpush1.msra.mxu0 0.0
      %1843 = vmatprep.subr.mxu0 0.0
      %1844 = vmatpush1.msra.mxu0 0.0
      %1845 = vmatprep.subr.mxu0 0.0
      %1846 = vmatpush1.msra.mxu0 0.0
      %1847 = vmatprep.subr.mxu0 0.0
      %1848 = vmatpush1.msra.mxu0 0.0
      %1849 = vmatprep.subr.mxu0 0.0
      %1850 = vmatpush1.msra.mxu0 0.0
      %1851 = vmatprep.subr.mxu0 0.0
      %1852 = vmatpush1.msra.mxu0 0.0
      %1853 = vmatprep.mubr.f32.mxu0 0.0
      %1854 = vmatmul.mubr.f32.gmra.mrb[0].mxu0 %v1778
      %v1855 = vpop.f32.mrb[0].mxu0
      %v1856 = vadd.f32 %v1775, %v1855
      %v1857 = vpop.f32.mrb[0].mxu0
      %1858 = vmatprep.mubr.f32.mxu0 0.0
      %1859 = vmatmul.mubr.f32.gmra.mrb[0].mxu0 %v1781
      %v1860 = vpop.f32.mrb[0].mxu0
      %v1861 = vadd.f32 %v1775, %v1860
      %v1862 = vpop.f32.mrb[0].mxu0
      %1863 = vmatprep.mubr.f32.mxu0 0.0
      %1864 = vmatmul.mubr.f32.gmra.mrb[0].mxu0 %v1784
      %v1865 = vpop.f32.mrb[0].mxu0
      %v1866 = vadd.f32 %v1775, %v1865
      %v1867 = vpop.f32.mrb[0].mxu0
      %1868 = vmatprep.mubr.f32.mxu0 0.0
      %1869 = vmatmul.mubr.f32.gmra.mrb[0].mxu0 %v1787
      %v1870 = vpop.f32.mrb[0].mxu0
      %v1871 = vadd.f32 %v1775, %v1870
      %v1872 = vpop.f32.mrb[0].mxu0
      %1873 = vdwg.mxu0
      %v1874 = vxor.u32 %v1856, 2147483648
      %v1875 = vxor.u32 %v1861, 2147483648
      %v1876 = vxor.u32 %v1866, 2147483648
      %v1877 = vxor.u32 %v1871, 2147483648
      %v1878 = vmul.f32 %v1874, 1.442695
      %v1879 = vpow.pop %v1878
      %v1880 = vmul.f32 %v1875, 1.442695
      %v1881 = vpow.pop %v1880
      %v1882 = vmul.f32 %v1876, 1.442695
      %v1883 = vpow.pop %v1882
      %v1884 = vmul.f32 %v1877, 1.442695
      %v1885 = vpow.pop %v1884
      %v1886 = vadd.f32 %v1879, 1.0
      %v1887 = vadd.f32 %v1881, 1.0
      %v1888 = vadd.f32 %v1883, 1.0
      %v1889 = vadd.f32 %v1885, 1.0
      %v1890 = vrcp.pop %v1886
      %v1891 = vmul.f32 1.0, %v1890
      %v1892 = vrcp.pop %v1887
      %v1893 = vmul.f32 1.0, %v1892
      %v1894 = vrcp.pop %v1888
      %v1895 = vmul.f32 1.0, %v1894
      %v1896 = vrcp.pop %v1889
      %v1897 = vmul.f32 1.0, %v1896
      %v1898 = vld [vmem:[%s8] sm:$0xff]
      %v1899 = vld [vmem:[%s8 + $0x8] sm:$0xff]
      %v1900 = vld [vmem:[%s9] sm:$0x1]
      %v1902 = vlaneseq
      %v1903 = vshrl.u32 %v1902, 7
      %v1904 = vsub.s32 0, %v1903
      %v1905 = vrot.slane %v1900, %v1904
      %vm1907 = vcmask 130048
      %v1909 = vsel %vm1907, %v1891, 0
      %v1912 = vsel %vm1907, %v1893, 0
      %v1915 = vsel %vm1907, %v1895, 0
      %v1918 = vsel %vm1907, %v1897, 0
      %1920 = vmatprep.subr.mxu0 0.0
      %1921 = vmatpush1.msra.mxu0 %v1898
      %1922 = vmatprep.subr.mxu0 0.0
      %1923 = vmatpush1.msra.mxu0 %v1899
      %1924 = vmatprep.subr.mxu0 0.0
      %1925 = vmatpush1.msra.mxu0 0.0
      %1926 = vmatprep.subr.mxu0 0.0
      %1927 = vmatpush1.msra.mxu0 0.0
      %1928 = vmatprep.subr.mxu0 0.0
      %1929 = vmatpush1.msra.mxu0 0.0
      %1930 = vmatprep.subr.mxu0 0.0
      %1931 = vmatpush1.msra.mxu0 0.0
      %1932 = vmatprep.subr.mxu0 0.0
      %1933 = vmatpush1.msra.mxu0 0.0
      %1934 = vmatprep.subr.mxu0 0.0
      %1935 = vmatpush1.msra.mxu0 0.0
      %1936 = vmatprep.subr.mxu0 0.0
      %1937 = vmatpush1.msra.mxu0 0.0
      %1938 = vmatprep.subr.mxu0 0.0
      %1939 = vmatpush1.msra.mxu0 0.0
      %1940 = vmatprep.subr.mxu0 0.0
      %1941 = vmatpush1.msra.mxu0 0.0
      %1942 = vmatprep.subr.mxu0 0.0
      %1943 = vmatpush1.msra.mxu0 0.0
      %1944 = vmatprep.subr.mxu0 0.0
      %1945 = vmatpush1.msra.mxu0 0.0
      %1946 = vmatprep.subr.mxu0 0.0
      %1947 = vmatpush1.msra.mxu0 0.0
      %1948 = vmatprep.subr.mxu0 0.0
      %1949 = vmatpush1.msra.mxu0 0.0
      %1950 = vmatprep.subr.mxu0 0.0
      %1951 = vmatpush1.msra.mxu0 0.0
      %1952 = vmatprep.subr.mxu0 0.0
      %1953 = vmatpush1.msra.mxu0 0.0
      %1954 = vmatprep.subr.mxu0 0.0
      %1955 = vmatpush1.msra.mxu0 0.0
      %1956 = vmatprep.subr.mxu0 0.0
      %1957 = vmatpush1.msra.mxu0 0.0
      %1958 = vmatprep.subr.mxu0 0.0
      %1959 = vmatpush1.msra.mxu0 0.0
      %1960 = vmatprep.subr.mxu0 0.0
      %1961 = vmatpush1.msra.mxu0 0.0
      %1962 = vmatprep.subr.mxu0 0.0
      %1963 = vmatpush1.msra.mxu0 0.0
      %1964 = vmatprep.subr.mxu0 0.0
      %1965 = vmatpush1.msra.mxu0 0.0
      %1966 = vmatprep.subr.mxu0 0.0
      %1967 = vmatpush1.msra.mxu0 0.0
      %1968 = vmatprep.subr.mxu0 0.0
      %1969 = vmatpush1.msra.mxu0 0.0
      %1970 = vmatprep.subr.mxu0 0.0
      %1971 = vmatpush1.msra.mxu0 0.0
      %1972 = vmatprep.subr.mxu0 0.0
      %1973 = vmatpush1.msra.mxu0 0.0
      %1974 = vmatprep.subr.mxu0 0.0
      %1975 = vmatpush1.msra.mxu0 0.0
      %1976 = vmatprep.subr.mxu0 0.0
      %1977 = vmatpush1.msra.mxu0 0.0
      %1978 = vmatprep.subr.mxu0 0.0
      %1979 = vmatpush1.msra.mxu0 0.0
      %1980 = vmatprep.subr.mxu0 0.0
      %1981 = vmatpush1.msra.mxu0 0.0
      %1982 = vmatprep.subr.mxu0 0.0
      %1983 = vmatpush1.msra.mxu0 0.0
      %1984 = vmatprep.mubr.f32.mxu0 0.0
      %1985 = vmatmul.mubr.f32.gmra.mrb[0].mxu0 %v1909
      %v1986 = vpop.f32.mrb[0].mxu0
      %v1987 = vadd.f32 %v1905, %v1986
      %v1988 = vpop.f32.mrb[0].mxu0
      %1989 = vmatprep.mubr.f32.mxu0 0.0
      %1990 = vmatmul.mubr.f32.gmra.mrb[0].mxu0 %v1912
      %v1991 = vpop.f32.mrb[0].mxu0
      %v1992 = vadd.f32 %v1905, %v1991
      %v1993 = vpop.f32.mrb[0].mxu0
      %1994 = vmatprep.mubr.f32.mxu0 0.0
      %1995 = vmatmul.mubr.f32.gmra.mrb[0].mxu0 %v1915
      %v1996 = vpop.f32.mrb[0].mxu0
      %v1997 = vadd.f32 %v1905, %v1996
      %v1998 = vpop.f32.mrb[0].mxu0
      %1999 = vmatprep.mubr.f32.mxu0 0.0
      %2000 = vmatmul.mubr.f32.gmra.mrb[0].mxu0 %v1918
      %v2001 = vpop.f32.mrb[0].mxu0
      %v2002 = vadd.f32 %v1905, %v2001
      %v2003 = vpop.f32.mrb[0].mxu0
      %2004 = vdwg.mxu0
      %v2005 = vxor.u32 %v1987, 2147483648
      %v2006 = vxor.u32 %v1992, 2147483648
      %v2007 = vxor.u32 %v1997, 2147483648
      %v2008 = vxor.u32 %v2002, 2147483648
      %v2009 = vmul.f32 %v2005, 1.442695
      %v2010 = vpow.pop %v2009
      %v2011 = vmul.f32 %v2006, 1.442695
      %v2012 = vpow.pop %v2011
      %v2013 = vmul.f32 %v2007, 1.442695
      %v2014 = vpow.pop %v2013
      %v2015 = vmul.f32 %v2008, 1.442695
      %v2016 = vpow.pop %v2015
      %v2017 = vadd.f32 %v2010, 1.0
      %v2018 = vadd.f32 %v2012, 1.0
      %v2019 = vadd.f32 %v2014, 1.0
      %v2020 = vadd.f32 %v2016, 1.0
      %v2021 = vrcp.pop %v2017
      %v2022 = vmul.f32 1.0, %v2021
      %v2023 = vrcp.pop %v2018
      %v2024 = vmul.f32 1.0, %v2023
      %v2025 = vrcp.pop %v2019
      %v2026 = vmul.f32 1.0, %v2025
      %v2027 = vrcp.pop %v2020
      %v2028 = vmul.f32 1.0, %v2027
      %vm2029 = vcmask 64512
      %2030 = vst.msk [vmem:[%s393] sm:$0xff] %vm2029, %v2022
      %2031 = vst.msk [vmem:[%s393 + $0x8] sm:$0xff] %vm2029, %v2024
      %2032 = vst.msk [vmem:[%s393 + $0x10] sm:$0xff] %vm2029, %v2026
      %2033 = vst.msk [vmem:[%s393 + $0x18] sm:$0xff] %vm2029, %v2028
      %p2034 = scmp.lt.s32.totalorder %s21, 1
      %s2035 = scalar_select %p2034, %s21, 1
      %s2036 = smul.addr %s2035, 4
      %s2037 = smul.addr %s2036, 8
      %s2038 = scalar_lea.vmem %s10, %s2037
      // Predicated region
      $region61: #{forward.1} parent=59 // pred_check
        %p2039 = pneg %p264
      $region62: #{forward.1} parent=59 // pred_check_branch
        %2041 = sbr.rel (%p2039) target = $region64
      $region63: #{forward.1} parent=59 // pred_region
        _
      $region64: #{forward.1} parent=59 // pred_fallthru
        _
    $region60: #{forward.1} parent=5 // pred_fallthru
      _
    %p2042 = scmp.le.s32.totalorder 2, %s16
    // Predicated region
    $region65: #{forward.1} parent=5 // pred_check
      %p2043 = pneg %p2042
    $region66: #{forward.1} parent=5 // pred_check_branch
      %2045 = sbr.rel (%p2043) target = $region68
    $region67: #{forward.1} parent=5 // pred_region
      %s2046 = ssub.s32 %s16, 2
      // Predicated region
      $region69: #{forward.1} parent=67 // pred_check
        %p2047 = pneg %p270
      $region70: #{forward.1} parent=67 // pred_check_branch
        %2049 = sbr.rel (%p2047) target = $region72
      $region71: #{forward.1} parent=67 // pred_region
        %p2050 = scmp.lt.s32.totalorder %s22, 1
        %s2051 = scalar_select %p2050, %s22, 1
        %s2052 = smul.addr %s2051, 4
        %s2053 = smul.addr %s2052, 8
        %s2054 = scalar_lea.vmem %s10, %s2053
      $region72: #{forward.1} parent=67 // pred_fallthru
        _
    $region68: #{forward.1} parent=5 // pred_fallthru
      _
  $region6: #{forward.1} parent=0 // loop_footer
    %s20 = sadd.s32 1, %s16
  $region7: #{forward.1} parent=0 // loop_footer_branch
    %15 = sbr.rel target = $region3
  $region8: #{forward.1} parent=0 // loop_exit
    _

</llo_original>
